<compile_context>
chip_gen: v7x
topology: tpu7x:2x2x1
jax: 0.10.0
libtpu: 0.0.40
codegen_flags: <defaults>
</compile_context>

<pallas_src>
import functools

import jax
import jax.numpy as jnp
from jax import lax
from jax.experimental import pallas as pl
from jax.experimental.pallas import tpu as pltpu


def _lstm_dense_kernel(num_layers, t_chunk, batch, hidden, *refs):
    """One grid step processes `t_chunk` timesteps for the whole batch.

    Refs, in order:
      zx0_ref    (t_chunk*batch, 4H)   layer-0 input projection (pre-scaled, +bias)
      whh0_ref   (H, 4H)               layer-0 recurrent weights (pre-scaled)
      [wihr_ref  (L-1, H, 4H)]         layers 1.. input weights   (only L > 1)
      [whhr_ref  (L-1, H, 4H)]         layers 1.. recurrent weights
      [br_ref    (L-1, 1, 4H)]         layers 1.. combined bias
      wd_ref     (H, Dout_pad)         dense weight (transposed, lane-padded)
      bd_ref     (1, Dout_pad)         dense bias (lane-padded)
      out_ref    (t_chunk*batch, Dout_pad)
      [zbuf_ref  scratch (t_chunk*batch, 4H)]  per-layer input projection (L > 1)
      hbuf_ref   scratch (t_chunk*batch, H)    current layer's h for every step
      h_ref      scratch (L, batch, H)         hidden state carried across chunks
      c_ref      scratch (L, batch, H)         cell state carried across chunks
    """
    if num_layers > 1:
        (zx0_ref, whh0_ref, wihr_ref, whhr_ref, br_ref, wd_ref, bd_ref,
         out_ref, zbuf_ref, hbuf_ref, h_ref, c_ref) = refs
    else:
        (zx0_ref, whh0_ref, wd_ref, bd_ref,
         out_ref, hbuf_ref, h_ref, c_ref) = refs
        wihr_ref = whhr_ref = br_ref = zbuf_ref = None

    H = hidden
    B = batch

    @pl.when(pl.program_id(0) == 0)
    def _():
        h_ref[...] = jnp.zeros_like(h_ref)
        c_ref[...] = jnp.zeros_like(c_ref)

    def run_layer(z_src_ref, whh, h0, c0):
        """Recurrence over t_chunk steps; only h_prev @ whh is on the serial path.

        z_src_ref holds the pre-scaled per-step input projection (+ bias) for
        this layer; whh is already resident in vregs; h/c live in the loop carry.
        Writes this layer's h for every step into hbuf_ref (off the critical path).
        """
        def step(t, carry):
            h_prev, c_prev = carry
            row = pl.multiple_of(t * B, B) if B > 1 else t
            z = z_src_ref[pl.ds(row, B), :] + jnp.dot(
                h_prev, whh, preferred_element_type=jnp.float32)
            # One full-lane-width tanh: i/f/o columns were pre-scaled by 0.5 so
            # sigmoid(a) == 0.5*(tanh(0.5*a)+1) falls out of the same push.
            tz = jnp.tanh(z)
            i = 0.5 * (tz[:, 0 * H:1 * H] + 1.0)
            f = 0.5 * (tz[:, 1 * H:2 * H] + 1.0)
            g = tz[:, 2 * H:3 * H]
            o = 0.5 * (tz[:, 3 * H:4 * H] + 1.0)
            c_new = f * c_prev + i * g
            h_new = o * jnp.tanh(c_new)
            hbuf_ref[pl.ds(row, B), :] = h_new
            return h_new, c_new

        return lax.fori_loop(0, t_chunk, step, (h0, c0),
                             unroll=min(t_chunk, 8))

    # ---- layer 0: input projection came pre-computed from the wrapper ----
    h_new, c_new = run_layer(zx0_ref, whh0_ref[...], h_ref[0], c_ref[0])
    h_ref[0] = h_new
    c_ref[0] = c_new

    # ---- layers 1..L-1: one big chunk-level input-projection matmul, then the
    #      per-step recurrence (static unroll over layers) ----
    for l in range(1, num_layers):
        zbuf_ref[...] = (jnp.dot(hbuf_ref[...], wihr_ref[l - 1],
                                 preferred_element_type=jnp.float32)
                         + br_ref[l - 1])
        h_new, c_new = run_layer(zbuf_ref, whhr_ref[l - 1], h_ref[l], c_ref[l])
        h_ref[l] = h_new
        c_ref[l] = c_new

    # ---- batched dense head + single lane-dense (unmasked) store per chunk ----
    out_ref[...] = (jnp.dot(hbuf_ref[...], wd_ref[...],
                            preferred_element_type=jnp.float32) + bd_ref[...])


def make_params(key, input_dim, hidden_dim, num_layers, output_dim):
    """Deterministic PyTorch-style init: U(-1/sqrt(H), 1/sqrt(H))."""
    H = hidden_dim
    k = 1.0 / jnp.sqrt(jnp.float32(H))
    lstm = []
    for l in range(num_layers):
        in_l = input_dim if l == 0 else H
        key, k1, k2, k3, k4 = jax.random.split(key, 5)
        W_ih = jax.random.uniform(k1, (4 * H, in_l), jnp.float32, -k, k)
        W_hh = jax.random.uniform(k2, (4 * H, H), jnp.float32, -k, k)
        b_ih = jax.random.uniform(k3, (4 * H,), jnp.float32, -k, k)
        b_hh = jax.random.uniform(k4, (4 * H,), jnp.float32, -k, k)
        lstm.append((W_ih, W_hh, b_ih, b_hh))
    key, k1, k2 = jax.random.split(key, 3)
    W_d = jax.random.uniform(k1, (output_dim, H), jnp.float32, -k, k)
    b_d = jax.random.uniform(k2, (output_dim,), jnp.float32, -k, k)
    return {"lstm": lstm, "dense": (W_d, b_d)}


def _pack_for_kernel(params, hidden_dim, num_layers):
    """PyTorch-layout weights -> fused-gate, transposed, gate-pre-scaled matrices.

    W (4H, in) -> W.T (in, 4H): columns [g*H:(g+1)*H] keep PyTorch gate order
    (i, f, g, o).  Biases are combined (b_ih + b_hh).  The i/f/o gate columns
    are pre-multiplied by 0.5 (exact in f32) so the kernel can evaluate all
    gates with a single full-width tanh.
    """
    H = hidden_dim
    gscale = jnp.concatenate([jnp.full((H,), 0.5, jnp.float32),
                              jnp.full((H,), 0.5, jnp.float32),
                              jnp.ones((H,), jnp.float32),
                              jnp.full((H,), 0.5, jnp.float32)])

    def pack_layer(l):
        W_ih, W_hh, b_ih, b_hh = params["lstm"][l]
        wih = W_ih.T * gscale                               # (in, 4H)
        whh = W_hh.T * gscale                               # (H,  4H)
        b = ((b_ih + b_hh) * gscale)[None, :]               # (1,  4H)
        return wih, whh, b

    wih0, whh0, b0 = pack_layer(0)
    if num_layers > 1:
        packed = [pack_layer(l) for l in range(1, num_layers)]
        wihr = jnp.stack([p[0] for p in packed])            # (L-1, H, 4H)
        whhr = jnp.stack([p[1] for p in packed])            # (L-1, H, 4H)
        br = jnp.stack([p[2] for p in packed])              # (L-1, 1, 4H)
    else:
        wihr = whhr = br = None

    W_d, b_d = params["dense"]
    wd = W_d.T                                              # (H, Dout)
    bd = b_d[None, :]                                       # (1, Dout)
    return wih0, whh0, b0, wihr, whhr, br, wd, bd


def lstm_dense_forward(x, params, *, input_dim, hidden_dim, num_layers, output_dim,
                       time_chunk=128):
    """x: [batch, seq, input_dim] -> [batch, seq, output_dim]."""
    B, S, Din = x.shape
    H, Dout = hidden_dim, output_dim
    assert Din == input_dim

    wih0, whh0, b0, wihr, whhr, br, wd, bd = _pack_for_kernel(params, H, num_layers)

    # Lane-dense output: pad Dout up to a multiple of 128 so the per-chunk
    # writeback is an unmasked full-tile store; sliced back in the wrapper.
    Dout_pad = ((Dout + 127) // 128) * 128
    wd_p = jnp.pad(wd, ((0, 0), (0, Dout_pad - Dout)))
    bd_p = jnp.pad(bd, ((0, 0), (0, Dout_pad - Dout)))

    # Time-major, flattened (t, b) -> rows so the kernel streams 2-D row blocks.
    x_tm = jnp.transpose(x, (1, 0, 2)).astype(jnp.float32)        # (S, B, Din)

    TC = S if S <= time_chunk else time_chunk
    n_chunks = pl.cdiv(S, TC)
    S_pad = n_chunks * TC
    if S_pad != S:
        # Padded steps only affect discarded rows; h_n/c_n are not returned.
        x_tm = jnp.pad(x_tm, ((0, S_pad - S), (0, 0), (0, 0)))
    x_flat = x_tm.reshape(S_pad * B, Din)

    # Layer-0 input projection (+ bias) done once by XLA: the kernel ingests a
    # lane-dense (TC*B, 4H=128) block instead of the narrow Din-wide x.
    zx0 = x_flat @ wih0 + b0                                      # (S_pad*B, 4H)

    kernel = functools.partial(_lstm_dense_kernel, num_layers, TC, B, H)

    # Weights use constant index maps (resident across the whole grid).  At
    # these sizes VMEM is not a concern; for large H/L on v7x, single-buffer
    # them with pipeline_mode=pl.Buffered(1).
    in_specs = [
        pl.BlockSpec((TC * B, 4 * H), lambda t: (t, 0)),          # zx0 (chunk-sliced)
        pl.BlockSpec((H, 4 * H), lambda t: (0, 0)),               # whh0
    ]
    args = [zx0, whh0]
    scratch = []
    if num_layers > 1:
        in_specs += [
            pl.BlockSpec((num_layers - 1, H, 4 * H), lambda t: (0, 0, 0)),  # wih rest
            pl.BlockSpec((num_layers - 1, H, 4 * H), lambda t: (0, 0, 0)),  # whh rest
            pl.BlockSpec((num_layers - 1, 1, 4 * H), lambda t: (0, 0, 0)),  # b rest
        ]
        args += [wihr, whhr, br]
        scratch.append(pltpu.VMEM((TC * B, 4 * H), jnp.float32))  # zbuf
    in_specs += [
        pl.BlockSpec((H, Dout_pad), lambda t: (0, 0)),            # dense W^T (padded)
        pl.BlockSpec((1, Dout_pad), lambda t: (0, 0)),            # dense b   (padded)
    ]
    args += [wd_p, bd_p]
    scratch += [
        pltpu.VMEM((TC * B, H), jnp.float32),                     # per-layer h buffer
        pltpu.VMEM((num_layers, B, H), jnp.float32),              # h state (carried)
        pltpu.VMEM((num_layers, B, H), jnp.float32),              # c state (carried)
    ]

    out_flat = pl.pallas_call(
        kernel,
        out_shape=jax.ShapeDtypeStruct((S_pad * B, Dout_pad), jnp.float32),
        grid_spec=pltpu.PrefetchScalarGridSpec(
            num_scalar_prefetch=0,
            grid=(n_chunks,),
            in_specs=in_specs,
            out_specs=pl.BlockSpec((TC * B, Dout_pad), lambda t: (t, 0)),
            scratch_shapes=scratch,
        ),
        compiler_params=pltpu.CompilerParams(
            # Recurrence: chunks are strictly sequential.  With B > 1 a leading
            # "parallel" batch-shard axis would exploit v7x's second TensorCore.
            dimension_semantics=("arbitrary",),
            vmem_limit_bytes=32 * 1024 * 1024,
        ),
    )(*args)

    out_tm = out_flat.reshape(S_pad, B, Dout_pad)[:S, :, :Dout]   # (S, B, Dout)
    return jnp.transpose(out_tm, (1, 0, 2))                       # (B, S, Dout)


def reference_forward(x, params, *, hidden_dim, num_layers):
    """Pure-JAX reference matching torch.nn.LSTM + Linear semantics."""
    B, S, _ = x.shape
    H = hidden_dim
    xt = jnp.transpose(x, (1, 0, 2)).astype(jnp.float32)
    h = [jnp.zeros((B, H), jnp.float32) for _ in range(num_layers)]
    c = [jnp.zeros((B, H), jnp.float32) for _ in range(num_layers)]
    ys = []
    for t in range(S):
        inp = xt[t]
        for l in range(num_layers):
            W_ih, W_hh, b_ih, b_hh = params["lstm"][l]
            z = inp @ W_ih.T + b_ih + h[l] @ W_hh.T + b_hh
            i = jax.nn.sigmoid(z[:, 0 * H:1 * H])
            f = jax.nn.sigmoid(z[:, 1 * H:2 * H])
            g = jnp.tanh(z[:, 2 * H:3 * H])
            o = jax.nn.sigmoid(z[:, 3 * H:4 * H])
            c[l] = f * c[l] + i * g
            h[l] = o * jnp.tanh(c[l])
            inp = h[l]
        ys.append(inp)
    y = jnp.stack(ys)                                # (S, B, H)
    W_d, b_d = params["dense"]
    out = y @ W_d.T + b_d                            # (S, B, Dout)
    return jnp.transpose(out, (1, 0, 2))


if __name__ == "__main__":
    input_dim, hidden_dim, num_layers, output_dim = 8, 32, 2, 16
    batch_size, seq_len = 1, 8   # module default batch_size == 1

    key = jax.random.PRNGKey(0)
    key, pkey, xkey = jax.random.split(key, 3)
    params = make_params(pkey, input_dim, hidden_dim, num_layers, output_dim)
    x = jax.random.normal(xkey, (batch_size, seq_len, input_dim), jnp.float32)

    out = lstm_dense_forward(
        x, params,
        input_dim=input_dim, hidden_dim=hidden_dim,
        num_layers=num_layers, output_dim=output_dim)
    out = jax.block_until_ready(out)

    ref = reference_forward(x, params, hidden_dim=hidden_dim, num_layers=num_layers)
    assert out.shape == (batch_size, seq_len, output_dim)
    max_err = float(jnp.max(jnp.abs(out - ref)))
    assert jnp.allclose(out, ref, atol=1e-4, rtol=1e-4), f"max abs err {max_err}"

    print("KERNEL_OK")
</pallas_src>

<mosaic_0001>
module attributes {stable_mosaic.version = 11 : i64} {
  func.func @_lstm_dense_kernel(%arg0: i32, %arg1: memref<8x128xf32, #tpu.memory_space<vmem>>, %arg2: memref<32x128xf32, #tpu.memory_space<vmem>>, %arg3: memref<1x32x128xf32, #tpu.memory_space<vmem>>, %arg4: memref<1x32x128xf32, #tpu.memory_space<vmem>>, %arg5: memref<1x1x128xf32, #tpu.memory_space<vmem>>, %arg6: memref<32x128xf32, #tpu.memory_space<vmem>>, %arg7: memref<1x128xf32, #tpu.memory_space<vmem>>, %arg8: memref<8x128xf32, #tpu.memory_space<vmem>>, %arg9: memref<8x128xf32, #tpu.memory_space<vmem>>, %arg10: memref<8x32xf32, #tpu.memory_space<vmem>>, %arg11: memref<2x1x32xf32, #tpu.memory_space<vmem>>, %arg12: memref<2x1x32xf32, #tpu.memory_space<vmem>>) attributes {dimension_semantics = [#tpu.dimension_semantics<arbitrary>], iteration_bounds = array<i64: 1>, scalar_prefetch = 0 : i64, scratch_operands = 4 : i64, tpu.core_type = #tpu.core_type<tc>, window_params = [{transform_indices = @transform_0, window_bounds = array<i64: 8, 128>}, {pipeline_mode = #tpu.pipeline_mode<synchronous>, transform_indices = @transform_1, window_bounds = array<i64: 32, 128>}, {pipeline_mode = #tpu.pipeline_mode<synchronous>, transform_indices = @transform_2, window_bounds = array<i64: 1, 32, 128>}, {pipeline_mode = #tpu.pipeline_mode<synchronous>, transform_indices = @transform_3, window_bounds = array<i64: 1, 32, 128>}, {pipeline_mode = #tpu.pipeline_mode<synchronous>, transform_indices = @transform_4, window_bounds = array<i64: 1, 1, 128>}, {pipeline_mode = #tpu.pipeline_mode<synchronous>, transform_indices = @transform_5, window_bounds = array<i64: 32, 128>}, {pipeline_mode = #tpu.pipeline_mode<synchronous>, transform_indices = @transform_6, window_bounds = array<i64: 1, 128>}, {transform_indices = @transform_7, window_bounds = array<i64: 8, 128>}]} {
    %c0_i32 = arith.constant 0 : i32
    %0 = arith.cmpi eq, %arg0, %c0_i32 : i32
    %1 = arith.extui %0 : i1 to i32
    %c0_i32_0 = arith.constant 0 : i32
    %2 = arith.cmpi ne, %1, %c0_i32_0 : i32
    scf.if %2 {
      %cst_201 = arith.constant 0.000000e+00 : f32
      %490 = vector.broadcast %cst_201 : f32 to vector<2x1x32xf32>
      %c0_202 = arith.constant 0 : index
      %c0_203 = arith.constant 0 : index
      %c0_204 = arith.constant 0 : index
      %491 = vector.load %arg11[%c0_202, %c0_203, %c0_204] : memref<2x1x32xf32, #tpu.memory_space<vmem>>, vector<2x1x32xf32>
      tpu.vector_store %arg11[%c0_202, %c0_203, %c0_204], %490 {strides = array<i32>} : memref<2x1x32xf32, #tpu.memory_space<vmem>>, vector<2x1x32xf32>,
      %cst_205 = arith.constant 0.000000e+00 : f32
      %492 = vector.broadcast %cst_205 : f32 to vector<2x1x32xf32>
      %c0_206 = arith.constant 0 : index
      %c0_207 = arith.constant 0 : index
      %c0_208 = arith.constant 0 : index
      %493 = vector.load %arg12[%c0_206, %c0_207, %c0_208] : memref<2x1x32xf32, #tpu.memory_space<vmem>>, vector<2x1x32xf32>
      tpu.vector_store %arg12[%c0_206, %c0_207, %c0_208], %492 {strides = array<i32>} : memref<2x1x32xf32, #tpu.memory_space<vmem>>, vector<2x1x32xf32>,
    } else {
    }
    %c0 = arith.constant 0 : index
    %c0_1 = arith.constant 0 : index
    %3 = vector.load %arg2[%c0, %c0_1] : memref<32x128xf32, #tpu.memory_space<vmem>>, vector<32x128xf32>
    %c0_2 = arith.constant 0 : index
    %c0_3 = arith.constant 0 : index
    %c0_4 = arith.constant 0 : index
    %4 = vector.load %arg11[%c0_2, %c0_3, %c0_4] : memref<2x1x32xf32, #tpu.memory_space<vmem>>, vector<1x1x32xf32>
    %5 = vector.shape_cast %4 : vector<1x1x32xf32> to vector<1x32xf32>
    %c0_5 = arith.constant 0 : index
    %c0_6 = arith.constant 0 : index
    %c0_7 = arith.constant 0 : index
    %6 = vector.load %arg12[%c0_5, %c0_6, %c0_7] : memref<2x1x32xf32, #tpu.memory_space<vmem>>, vector<1x1x32xf32>
    %7 = vector.shape_cast %6 : vector<1x1x32xf32> to vector<1x32xf32>
    %c0_i32_8 = arith.constant 0 : i32
    %8 = arith.index_cast %c0_i32_8 : i32 to index
    %c0_9 = arith.constant 0 : index
    %9 = vector.load %arg1[%8, %c0_9] : memref<8x128xf32, #tpu.memory_space<vmem>>, vector<1x128xf32>
    %cst = arith.constant dense<0.000000e+00> : vector<1x128xf32>
    %10 = tpu.matmul %5, %3, %cst {dimension_numbers = #tpu.dot_dimension_numbers<[1], [0], [0], [1], [0, 0, 1, 1], [], []>} : vector<1x32xf32>, vector<32x128xf32>, vector<1x128xf32> -> vector<1x128xf32>
    %11 = arith.addf %9, %10 : vector<1x128xf32>
    %12 = math.tanh %11 : vector<1x128xf32>
    %13 = vector.extract_strided_slice %12 {offsets = [0, 0], sizes = [1, 32], strides = [1, 1]} : vector<1x128xf32> to vector<1x32xf32>
    %cst_10 = arith.constant 1.000000e+00 : f32
    %14 = vector.broadcast %cst_10 : f32 to vector<1x32xf32>
    %15 = arith.addf %13, %14 : vector<1x32xf32>
    %cst_11 = arith.constant 5.000000e-01 : f32
    %16 = vector.broadcast %cst_11 : f32 to vector<1x32xf32>
    %17 = arith.mulf %16, %15 : vector<1x32xf32>
    %18 = vector.extract_strided_slice %12 {offsets = [0, 32], sizes = [1, 32], strides = [1, 1]} : vector<1x128xf32> to vector<1x32xf32>
    %cst_12 = arith.constant 1.000000e+00 : f32
    %19 = vector.broadcast %cst_12 : f32 to vector<1x32xf32>
    %20 = arith.addf %18, %19 : vector<1x32xf32>
    %cst_13 = arith.constant 5.000000e-01 : f32
    %21 = vector.broadcast %cst_13 : f32 to vector<1x32xf32>
    %22 = arith.mulf %21, %20 : vector<1x32xf32>
    %23 = vector.extract_strided_slice %12 {offsets = [0, 64], sizes = [1, 32], strides = [1, 1]} : vector<1x128xf32> to vector<1x32xf32>
    %24 = vector.extract_strided_slice %12 {offsets = [0, 96], sizes = [1, 32], strides = [1, 1]} : vector<1x128xf32> to vector<1x32xf32>
    %cst_14 = arith.constant 1.000000e+00 : f32
    %25 = vector.broadcast %cst_14 : f32 to vector<1x32xf32>
    %26 = arith.addf %24, %25 : vector<1x32xf32>
    %cst_15 = arith.constant 5.000000e-01 : f32
    %27 = vector.broadcast %cst_15 : f32 to vector<1x32xf32>
    %28 = arith.mulf %27, %26 : vector<1x32xf32>
    %29 = arith.mulf %22, %7 : vector<1x32xf32>
    %30 = arith.mulf %17, %23 : vector<1x32xf32>
    %31 = arith.addf %29, %30 : vector<1x32xf32>
    %32 = math.tanh %31 : vector<1x32xf32>
    %33 = arith.mulf %28, %32 : vector<1x32xf32>
    %34 = arith.index_cast %c0_i32_8 : i32 to index
    %c0_16 = arith.constant 0 : index
    %35 = vector.load %arg10[%34, %c0_16] : memref<8x32xf32, #tpu.memory_space<vmem>>, vector<1x32xf32>
    tpu.vector_store %arg10[%34, %c0_16], %33 {strides = array<i32>} : memref<8x32xf32, #tpu.memory_space<vmem>>, vector<1x32xf32>,
    %c1_i32 = arith.constant 1 : i32
    %36 = arith.index_cast %c1_i32 : i32 to index
    %c0_17 = arith.constant 0 : index
    %37 = vector.load %arg1[%36, %c0_17] : memref<8x128xf32, #tpu.memory_space<vmem>>, vector<1x128xf32>
    %cst_18 = arith.constant dense<0.000000e+00> : vector<1x128xf32>
    %38 = tpu.matmul %33, %3, %cst_18 {dimension_numbers = #tpu.dot_dimension_numbers<[1], [0], [0], [1], [0, 0, 1, 1], [], []>} : vector<1x32xf32>, vector<32x128xf32>, vector<1x128xf32> -> vector<1x128xf32>
    %39 = arith.addf %37, %38 : vector<1x128xf32>
    %40 = math.tanh %39 : vector<1x128xf32>
    %41 = vector.extract_strided_slice %40 {offsets = [0, 0], sizes = [1, 32], strides = [1, 1]} : vector<1x128xf32> to vector<1x32xf32>
    %cst_19 = arith.constant 1.000000e+00 : f32
    %42 = vector.broadcast %cst_19 : f32 to vector<1x32xf32>
    %43 = arith.addf %41, %42 : vector<1x32xf32>
    %cst_20 = arith.constant 5.000000e-01 : f32
    %44 = vector.broadcast %cst_20 : f32 to vector<1x32xf32>
    %45 = arith.mulf %44, %43 : vector<1x32xf32>
    %46 = vector.extract_strided_slice %40 {offsets = [0, 32], sizes = [1, 32], strides = [1, 1]} : vector<1x128xf32> to vector<1x32xf32>
    %cst_21 = arith.constant 1.000000e+00 : f32
    %47 = vector.broadcast %cst_21 : f32 to vector<1x32xf32>
    %48 = arith.addf %46, %47 : vector<1x32xf32>
    %cst_22 = arith.constant 5.000000e-01 : f32
    %49 = vector.broadcast %cst_22 : f32 to vector<1x32xf32>
    %50 = arith.mulf %49, %48 : vector<1x32xf32>
    %51 = vector.extract_strided_slice %40 {offsets = [0, 64], sizes = [1, 32], strides = [1, 1]} : vector<1x128xf32> to vector<1x32xf32>
    %52 = vector.extract_strided_slice %40 {offsets = [0, 96], sizes = [1, 32], strides = [1, 1]} : vector<1x128xf32> to vector<1x32xf32>
    %cst_23 = arith.constant 1.000000e+00 : f32
    %53 = vector.broadcast %cst_23 : f32 to vector<1x32xf32>
    %54 = arith.addf %52, %53 : vector<1x32xf32>
    %cst_24 = arith.constant 5.000000e-01 : f32
    %55 = vector.broadcast %cst_24 : f32 to vector<1x32xf32>
    %56 = arith.mulf %55, %54 : vector<1x32xf32>
    %57 = arith.mulf %50, %31 : vector<1x32xf32>
    %58 = arith.mulf %45, %51 : vector<1x32xf32>
    %59 = arith.addf %57, %58 : vector<1x32xf32>
    %60 = math.tanh %59 : vector<1x32xf32>
    %61 = arith.mulf %56, %60 : vector<1x32xf32>
    %62 = arith.index_cast %c1_i32 : i32 to index
    %c0_25 = arith.constant 0 : index
    %63 = vector.load %arg10[%62, %c0_25] : memref<8x32xf32, #tpu.memory_space<vmem>>, vector<1x32xf32>
    tpu.vector_store %arg10[%62, %c0_25], %61 {strides = array<i32>} : memref<8x32xf32, #tpu.memory_space<vmem>>, vector<1x32xf32>,
    %c2_i32 = arith.constant 2 : i32
    %64 = arith.index_cast %c2_i32 : i32 to index
    %c0_26 = arith.constant 0 : index
    %65 = vector.load %arg1[%64, %c0_26] : memref<8x128xf32, #tpu.memory_space<vmem>>, vector<1x128xf32>
    %cst_27 = arith.constant dense<0.000000e+00> : vector<1x128xf32>
    %66 = tpu.matmul %61, %3, %cst_27 {dimension_numbers = #tpu.dot_dimension_numbers<[1], [0], [0], [1], [0, 0, 1, 1], [], []>} : vector<1x32xf32>, vector<32x128xf32>, vector<1x128xf32> -> vector<1x128xf32>
    %67 = arith.addf %65, %66 : vector<1x128xf32>
    %68 = math.tanh %67 : vector<1x128xf32>
    %69 = vector.extract_strided_slice %68 {offsets = [0, 0], sizes = [1, 32], strides = [1, 1]} : vector<1x128xf32> to vector<1x32xf32>
    %cst_28 = arith.constant 1.000000e+00 : f32
    %70 = vector.broadcast %cst_28 : f32 to vector<1x32xf32>
    %71 = arith.addf %69, %70 : vector<1x32xf32>
    %cst_29 = arith.constant 5.000000e-01 : f32
    %72 = vector.broadcast %cst_29 : f32 to vector<1x32xf32>
    %73 = arith.mulf %72, %71 : vector<1x32xf32>
    %74 = vector.extract_strided_slice %68 {offsets = [0, 32], sizes = [1, 32], strides = [1, 1]} : vector<1x128xf32> to vector<1x32xf32>
    %cst_30 = arith.constant 1.000000e+00 : f32
    %75 = vector.broadcast %cst_30 : f32 to vector<1x32xf32>
    %76 = arith.addf %74, %75 : vector<1x32xf32>
    %cst_31 = arith.constant 5.000000e-01 : f32
    %77 = vector.broadcast %cst_31 : f32 to vector<1x32xf32>
    %78 = arith.mulf %77, %76 : vector<1x32xf32>
    %79 = vector.extract_strided_slice %68 {offsets = [0, 64], sizes = [1, 32], strides = [1, 1]} : vector<1x128xf32> to vector<1x32xf32>
    %80 = vector.extract_strided_slice %68 {offsets = [0, 96], sizes = [1, 32], strides = [1, 1]} : vector<1x128xf32> to vector<1x32xf32>
    %cst_32 = arith.constant 1.000000e+00 : f32
    %81 = vector.broadcast %cst_32 : f32 to vector<1x32xf32>
    %82 = arith.addf %80, %81 : vector<1x32xf32>
    %cst_33 = arith.constant 5.000000e-01 : f32
    %83 = vector.broadcast %cst_33 : f32 to vector<1x32xf32>
    %84 = arith.mulf %83, %82 : vector<1x32xf32>
    %85 = arith.mulf %78, %59 : vector<1x32xf32>
    %86 = arith.mulf %73, %79 : vector<1x32xf32>
    %87 = arith.addf %85, %86 : vector<1x32xf32>
    %88 = math.tanh %87 : vector<1x32xf32>
    %89 = arith.mulf %84, %88 : vector<1x32xf32>
    %90 = arith.index_cast %c2_i32 : i32 to index
    %c0_34 = arith.constant 0 : index
    %91 = vector.load %arg10[%90, %c0_34] : memref<8x32xf32, #tpu.memory_space<vmem>>, vector<1x32xf32>
    tpu.vector_store %arg10[%90, %c0_34], %89 {strides = array<i32>} : memref<8x32xf32, #tpu.memory_space<vmem>>, vector<1x32xf32>,
    %c3_i32 = arith.constant 3 : i32
    %92 = arith.index_cast %c3_i32 : i32 to index
    %c0_35 = arith.constant 0 : index
    %93 = vector.load %arg1[%92, %c0_35] : memref<8x128xf32, #tpu.memory_space<vmem>>, vector<1x128xf32>
    %cst_36 = arith.constant dense<0.000000e+00> : vector<1x128xf32>
    %94 = tpu.matmul %89, %3, %cst_36 {dimension_numbers = #tpu.dot_dimension_numbers<[1], [0], [0], [1], [0, 0, 1, 1], [], []>} : vector<1x32xf32>, vector<32x128xf32>, vector<1x128xf32> -> vector<1x128xf32>
    %95 = arith.addf %93, %94 : vector<1x128xf32>
    %96 = math.tanh %95 : vector<1x128xf32>
    %97 = vector.extract_strided_slice %96 {offsets = [0, 0], sizes = [1, 32], strides = [1, 1]} : vector<1x128xf32> to vector<1x32xf32>
    %cst_37 = arith.constant 1.000000e+00 : f32
    %98 = vector.broadcast %cst_37 : f32 to vector<1x32xf32>
    %99 = arith.addf %97, %98 : vector<1x32xf32>
    %cst_38 = arith.constant 5.000000e-01 : f32
    %100 = vector.broadcast %cst_38 : f32 to vector<1x32xf32>
    %101 = arith.mulf %100, %99 : vector<1x32xf32>
    %102 = vector.extract_strided_slice %96 {offsets = [0, 32], sizes = [1, 32], strides = [1, 1]} : vector<1x128xf32> to vector<1x32xf32>
    %cst_39 = arith.constant 1.000000e+00 : f32
    %103 = vector.broadcast %cst_39 : f32 to vector<1x32xf32>
    %104 = arith.addf %102, %103 : vector<1x32xf32>
    %cst_40 = arith.constant 5.000000e-01 : f32
    %105 = vector.broadcast %cst_40 : f32 to vector<1x32xf32>
    %106 = arith.mulf %105, %104 : vector<1x32xf32>
    %107 = vector.extract_strided_slice %96 {offsets = [0, 64], sizes = [1, 32], strides = [1, 1]} : vector<1x128xf32> to vector<1x32xf32>
    %108 = vector.extract_strided_slice %96 {offsets = [0, 96], sizes = [1, 32], strides = [1, 1]} : vector<1x128xf32> to vector<1x32xf32>
    %cst_41 = arith.constant 1.000000e+00 : f32
    %109 = vector.broadcast %cst_41 : f32 to vector<1x32xf32>
    %110 = arith.addf %108, %109 : vector<1x32xf32>
    %cst_42 = arith.constant 5.000000e-01 : f32
    %111 = vector.broadcast %cst_42 : f32 to vector<1x32xf32>
    %112 = arith.mulf %111, %110 : vector<1x32xf32>
    %113 = arith.mulf %106, %87 : vector<1x32xf32>
    %114 = arith.mulf %101, %107 : vector<1x32xf32>
    %115 = arith.addf %113, %114 : vector<1x32xf32>
    %116 = math.tanh %115 : vector<1x32xf32>
    %117 = arith.mulf %112, %116 : vector<1x32xf32>
    %118 = arith.index_cast %c3_i32 : i32 to index
    %c0_43 = arith.constant 0 : index
    %119 = vector.load %arg10[%118, %c0_43] : memref<8x32xf32, #tpu.memory_space<vmem>>, vector<1x32xf32>
    tpu.vector_store %arg10[%118, %c0_43], %117 {strides = array<i32>} : memref<8x32xf32, #tpu.memory_space<vmem>>, vector<1x32xf32>,
    %c4_i32 = arith.constant 4 : i32
    %120 = arith.index_cast %c4_i32 : i32 to index
    %c0_44 = arith.constant 0 : index
    %121 = vector.load %arg1[%120, %c0_44] : memref<8x128xf32, #tpu.memory_space<vmem>>, vector<1x128xf32>
    %cst_45 = arith.constant dense<0.000000e+00> : vector<1x128xf32>
    %122 = tpu.matmul %117, %3, %cst_45 {dimension_numbers = #tpu.dot_dimension_numbers<[1], [0], [0], [1], [0, 0, 1, 1], [], []>} : vector<1x32xf32>, vector<32x128xf32>, vector<1x128xf32> -> vector<1x128xf32>
    %123 = arith.addf %121, %122 : vector<1x128xf32>
    %124 = math.tanh %123 : vector<1x128xf32>
    %125 = vector.extract_strided_slice %124 {offsets = [0, 0], sizes = [1, 32], strides = [1, 1]} : vector<1x128xf32> to vector<1x32xf32>
    %cst_46 = arith.constant 1.000000e+00 : f32
    %126 = vector.broadcast %cst_46 : f32 to vector<1x32xf32>
    %127 = arith.addf %125, %126 : vector<1x32xf32>
    %cst_47 = arith.constant 5.000000e-01 : f32
    %128 = vector.broadcast %cst_47 : f32 to vector<1x32xf32>
    %129 = arith.mulf %128, %127 : vector<1x32xf32>
    %130 = vector.extract_strided_slice %124 {offsets = [0, 32], sizes = [1, 32], strides = [1, 1]} : vector<1x128xf32> to vector<1x32xf32>
    %cst_48 = arith.constant 1.000000e+00 : f32
    %131 = vector.broadcast %cst_48 : f32 to vector<1x32xf32>
    %132 = arith.addf %130, %131 : vector<1x32xf32>
    %cst_49 = arith.constant 5.000000e-01 : f32
    %133 = vector.broadcast %cst_49 : f32 to vector<1x32xf32>
    %134 = arith.mulf %133, %132 : vector<1x32xf32>
    %135 = vector.extract_strided_slice %124 {offsets = [0, 64], sizes = [1, 32], strides = [1, 1]} : vector<1x128xf32> to vector<1x32xf32>
    %136 = vector.extract_strided_slice %124 {offsets = [0, 96], sizes = [1, 32], strides = [1, 1]} : vector<1x128xf32> to vector<1x32xf32>
    %cst_50 = arith.constant 1.000000e+00 : f32
    %137 = vector.broadcast %cst_50 : f32 to vector<1x32xf32>
    %138 = arith.addf %136, %137 : vector<1x32xf32>
    %cst_51 = arith.constant 5.000000e-01 : f32
    %139 = vector.broadcast %cst_51 : f32 to vector<1x32xf32>
    %140 = arith.mulf %139, %138 : vector<1x32xf32>
    %141 = arith.mulf %134, %115 : vector<1x32xf32>
    %142 = arith.mulf %129, %135 : vector<1x32xf32>
    %143 = arith.addf %141, %142 : vector<1x32xf32>
    %144 = math.tanh %143 : vector<1x32xf32>
    %145 = arith.mulf %140, %144 : vector<1x32xf32>
    %146 = arith.index_cast %c4_i32 : i32 to index
    %c0_52 = arith.constant 0 : index
    %147 = vector.load %arg10[%146, %c0_52] : memref<8x32xf32, #tpu.memory_space<vmem>>, vector<1x32xf32>
    tpu.vector_store %arg10[%146, %c0_52], %145 {strides = array<i32>} : memref<8x32xf32, #tpu.memory_space<vmem>>, vector<1x32xf32>,
    %c5_i32 = arith.constant 5 : i32
    %148 = arith.index_cast %c5_i32 : i32 to index
    %c0_53 = arith.constant 0 : index
    %149 = vector.load %arg1[%148, %c0_53] : memref<8x128xf32, #tpu.memory_space<vmem>>, vector<1x128xf32>
    %cst_54 = arith.constant dense<0.000000e+00> : vector<1x128xf32>
    %150 = tpu.matmul %145, %3, %cst_54 {dimension_numbers = #tpu.dot_dimension_numbers<[1], [0], [0], [1], [0, 0, 1, 1], [], []>} : vector<1x32xf32>, vector<32x128xf32>, vector<1x128xf32> -> vector<1x128xf32>
    %151 = arith.addf %149, %150 : vector<1x128xf32>
    %152 = math.tanh %151 : vector<1x128xf32>
    %153 = vector.extract_strided_slice %152 {offsets = [0, 0], sizes = [1, 32], strides = [1, 1]} : vector<1x128xf32> to vector<1x32xf32>
    %cst_55 = arith.constant 1.000000e+00 : f32
    %154 = vector.broadcast %cst_55 : f32 to vector<1x32xf32>
    %155 = arith.addf %153, %154 : vector<1x32xf32>
    %cst_56 = arith.constant 5.000000e-01 : f32
    %156 = vector.broadcast %cst_56 : f32 to vector<1x32xf32>
    %157 = arith.mulf %156, %155 : vector<1x32xf32>
    %158 = vector.extract_strided_slice %152 {offsets = [0, 32], sizes = [1, 32], strides = [1, 1]} : vector<1x128xf32> to vector<1x32xf32>
    %cst_57 = arith.constant 1.000000e+00 : f32
    %159 = vector.broadcast %cst_57 : f32 to vector<1x32xf32>
    %160 = arith.addf %158, %159 : vector<1x32xf32>
    %cst_58 = arith.constant 5.000000e-01 : f32
    %161 = vector.broadcast %cst_58 : f32 to vector<1x32xf32>
    %162 = arith.mulf %161, %160 : vector<1x32xf32>
    %163 = vector.extract_strided_slice %152 {offsets = [0, 64], sizes = [1, 32], strides = [1, 1]} : vector<1x128xf32> to vector<1x32xf32>
    %164 = vector.extract_strided_slice %152 {offsets = [0, 96], sizes = [1, 32], strides = [1, 1]} : vector<1x128xf32> to vector<1x32xf32>
    %cst_59 = arith.constant 1.000000e+00 : f32
    %165 = vector.broadcast %cst_59 : f32 to vector<1x32xf32>
    %166 = arith.addf %164, %165 : vector<1x32xf32>
    %cst_60 = arith.constant 5.000000e-01 : f32
    %167 = vector.broadcast %cst_60 : f32 to vector<1x32xf32>
    %168 = arith.mulf %167, %166 : vector<1x32xf32>
    %169 = arith.mulf %162, %143 : vector<1x32xf32>
    %170 = arith.mulf %157, %163 : vector<1x32xf32>
    %171 = arith.addf %169, %170 : vector<1x32xf32>
    %172 = math.tanh %171 : vector<1x32xf32>
    %173 = arith.mulf %168, %172 : vector<1x32xf32>
    %174 = arith.index_cast %c5_i32 : i32 to index
    %c0_61 = arith.constant 0 : index
    %175 = vector.load %arg10[%174, %c0_61] : memref<8x32xf32, #tpu.memory_space<vmem>>, vector<1x32xf32>
    tpu.vector_store %arg10[%174, %c0_61], %173 {strides = array<i32>} : memref<8x32xf32, #tpu.memory_space<vmem>>, vector<1x32xf32>,
    %c6_i32 = arith.constant 6 : i32
    %176 = arith.index_cast %c6_i32 : i32 to index
    %c0_62 = arith.constant 0 : index
    %177 = vector.load %arg1[%176, %c0_62] : memref<8x128xf32, #tpu.memory_space<vmem>>, vector<1x128xf32>
    %cst_63 = arith.constant dense<0.000000e+00> : vector<1x128xf32>
    %178 = tpu.matmul %173, %3, %cst_63 {dimension_numbers = #tpu.dot_dimension_numbers<[1], [0], [0], [1], [0, 0, 1, 1], [], []>} : vector<1x32xf32>, vector<32x128xf32>, vector<1x128xf32> -> vector<1x128xf32>
    %179 = arith.addf %177, %178 : vector<1x128xf32>
    %180 = math.tanh %179 : vector<1x128xf32>
    %181 = vector.extract_strided_slice %180 {offsets = [0, 0], sizes = [1, 32], strides = [1, 1]} : vector<1x128xf32> to vector<1x32xf32>
    %cst_64 = arith.constant 1.000000e+00 : f32
    %182 = vector.broadcast %cst_64 : f32 to vector<1x32xf32>
    %183 = arith.addf %181, %182 : vector<1x32xf32>
    %cst_65 = arith.constant 5.000000e-01 : f32
    %184 = vector.broadcast %cst_65 : f32 to vector<1x32xf32>
    %185 = arith.mulf %184, %183 : vector<1x32xf32>
    %186 = vector.extract_strided_slice %180 {offsets = [0, 32], sizes = [1, 32], strides = [1, 1]} : vector<1x128xf32> to vector<1x32xf32>
    %cst_66 = arith.constant 1.000000e+00 : f32
    %187 = vector.broadcast %cst_66 : f32 to vector<1x32xf32>
    %188 = arith.addf %186, %187 : vector<1x32xf32>
    %cst_67 = arith.constant 5.000000e-01 : f32
    %189 = vector.broadcast %cst_67 : f32 to vector<1x32xf32>
    %190 = arith.mulf %189, %188 : vector<1x32xf32>
    %191 = vector.extract_strided_slice %180 {offsets = [0, 64], sizes = [1, 32], strides = [1, 1]} : vector<1x128xf32> to vector<1x32xf32>
    %192 = vector.extract_strided_slice %180 {offsets = [0, 96], sizes = [1, 32], strides = [1, 1]} : vector<1x128xf32> to vector<1x32xf32>
    %cst_68 = arith.constant 1.000000e+00 : f32
    %193 = vector.broadcast %cst_68 : f32 to vector<1x32xf32>
    %194 = arith.addf %192, %193 : vector<1x32xf32>
    %cst_69 = arith.constant 5.000000e-01 : f32
    %195 = vector.broadcast %cst_69 : f32 to vector<1x32xf32>
    %196 = arith.mulf %195, %194 : vector<1x32xf32>
    %197 = arith.mulf %190, %171 : vector<1x32xf32>
    %198 = arith.mulf %185, %191 : vector<1x32xf32>
    %199 = arith.addf %197, %198 : vector<1x32xf32>
    %200 = math.tanh %199 : vector<1x32xf32>
    %201 = arith.mulf %196, %200 : vector<1x32xf32>
    %202 = arith.index_cast %c6_i32 : i32 to index
    %c0_70 = arith.constant 0 : index
    %203 = vector.load %arg10[%202, %c0_70] : memref<8x32xf32, #tpu.memory_space<vmem>>, vector<1x32xf32>
    tpu.vector_store %arg10[%202, %c0_70], %201 {strides = array<i32>} : memref<8x32xf32, #tpu.memory_space<vmem>>, vector<1x32xf32>,
    %c7_i32 = arith.constant 7 : i32
    %204 = arith.index_cast %c7_i32 : i32 to index
    %c0_71 = arith.constant 0 : index
    %205 = vector.load %arg1[%204, %c0_71] : memref<8x128xf32, #tpu.memory_space<vmem>>, vector<1x128xf32>
    %cst_72 = arith.constant dense<0.000000e+00> : vector<1x128xf32>
    %206 = tpu.matmul %201, %3, %cst_72 {dimension_numbers = #tpu.dot_dimension_numbers<[1], [0], [0], [1], [0, 0, 1, 1], [], []>} : vector<1x32xf32>, vector<32x128xf32>, vector<1x128xf32> -> vector<1x128xf32>
    %207 = arith.addf %205, %206 : vector<1x128xf32>
    %208 = math.tanh %207 : vector<1x128xf32>
    %209 = vector.extract_strided_slice %208 {offsets = [0, 0], sizes = [1, 32], strides = [1, 1]} : vector<1x128xf32> to vector<1x32xf32>
    %cst_73 = arith.constant 1.000000e+00 : f32
    %210 = vector.broadcast %cst_73 : f32 to vector<1x32xf32>
    %211 = arith.addf %209, %210 : vector<1x32xf32>
    %cst_74 = arith.constant 5.000000e-01 : f32
    %212 = vector.broadcast %cst_74 : f32 to vector<1x32xf32>
    %213 = arith.mulf %212, %211 : vector<1x32xf32>
    %214 = vector.extract_strided_slice %208 {offsets = [0, 32], sizes = [1, 32], strides = [1, 1]} : vector<1x128xf32> to vector<1x32xf32>
    %cst_75 = arith.constant 1.000000e+00 : f32
    %215 = vector.broadcast %cst_75 : f32 to vector<1x32xf32>
    %216 = arith.addf %214, %215 : vector<1x32xf32>
    %cst_76 = arith.constant 5.000000e-01 : f32
    %217 = vector.broadcast %cst_76 : f32 to vector<1x32xf32>
    %218 = arith.mulf %217, %216 : vector<1x32xf32>
    %219 = vector.extract_strided_slice %208 {offsets = [0, 64], sizes = [1, 32], strides = [1, 1]} : vector<1x128xf32> to vector<1x32xf32>
    %220 = vector.extract_strided_slice %208 {offsets = [0, 96], sizes = [1, 32], strides = [1, 1]} : vector<1x128xf32> to vector<1x32xf32>
    %cst_77 = arith.constant 1.000000e+00 : f32
    %221 = vector.broadcast %cst_77 : f32 to vector<1x32xf32>
    %222 = arith.addf %220, %221 : vector<1x32xf32>
    %cst_78 = arith.constant 5.000000e-01 : f32
    %223 = vector.broadcast %cst_78 : f32 to vector<1x32xf32>
    %224 = arith.mulf %223, %222 : vector<1x32xf32>
    %225 = arith.mulf %218, %199 : vector<1x32xf32>
    %226 = arith.mulf %213, %219 : vector<1x32xf32>
    %227 = arith.addf %225, %226 : vector<1x32xf32>
    %228 = math.tanh %227 : vector<1x32xf32>
    %229 = arith.mulf %224, %228 : vector<1x32xf32>
    %230 = arith.index_cast %c7_i32 : i32 to index
    %c0_79 = arith.constant 0 : index
    %231 = vector.load %arg10[%230, %c0_79] : memref<8x32xf32, #tpu.memory_space<vmem>>, vector<1x32xf32>
    tpu.vector_store %arg10[%230, %c0_79], %229 {strides = array<i32>} : memref<8x32xf32, #tpu.memory_space<vmem>>, vector<1x32xf32>,
    %c8_i32 = arith.constant 8 : i32
    %c0_80 = arith.constant 0 : index
    %c0_81 = arith.constant 0 : index
    %c0_82 = arith.constant 0 : index
    %232 = vector.load %arg11[%c0_80, %c0_81, %c0_82] : memref<2x1x32xf32, #tpu.memory_space<vmem>>, vector<1x1x32xf32>
    %233 = vector.shape_cast %232 : vector<1x1x32xf32> to vector<1x32xf32>
    %234 = vector.shape_cast %229 : vector<1x32xf32> to vector<1x1x32xf32>
    tpu.vector_store %arg11[%c0_80, %c0_81, %c0_82], %234 {strides = array<i32>} : memref<2x1x32xf32, #tpu.memory_space<vmem>>, vector<1x1x32xf32>,
    %c0_83 = arith.constant 0 : index
    %c0_84 = arith.constant 0 : index
    %c0_85 = arith.constant 0 : index
    %235 = vector.load %arg12[%c0_83, %c0_84, %c0_85] : memref<2x1x32xf32, #tpu.memory_space<vmem>>, vector<1x1x32xf32>
    %236 = vector.shape_cast %235 : vector<1x1x32xf32> to vector<1x32xf32>
    %237 = vector.shape_cast %227 : vector<1x32xf32> to vector<1x1x32xf32>
    tpu.vector_store %arg12[%c0_83, %c0_84, %c0_85], %237 {strides = array<i32>} : memref<2x1x32xf32, #tpu.memory_space<vmem>>, vector<1x1x32xf32>,
    %c0_86 = arith.constant 0 : index
    %c0_87 = arith.constant 0 : index
    %238 = vector.load %arg10[%c0_86, %c0_87] : memref<8x32xf32, #tpu.memory_space<vmem>>, vector<8x32xf32>
    %c0_88 = arith.constant 0 : index
    %c0_89 = arith.constant 0 : index
    %c0_90 = arith.constant 0 : index
    %239 = vector.load %arg3[%c0_88, %c0_89, %c0_90] : memref<1x32x128xf32, #tpu.memory_space<vmem>>, vector<1x32x128xf32>
    %240 = vector.shape_cast %239 : vector<1x32x128xf32> to vector<32x128xf32>
    %cst_91 = arith.constant dense<0.000000e+00> : vector<8x128xf32>
    %241 = tpu.matmul %238, %240, %cst_91 {dimension_numbers = #tpu.dot_dimension_numbers<[1], [0], [0], [1], [0, 0, 1, 1], [], []>} : vector<8x32xf32>, vector<32x128xf32>, vector<8x128xf32> -> vector<8x128xf32>
    %c0_92 = arith.constant 0 : index
    %c0_93 = arith.constant 0 : index
    %c0_94 = arith.constant 0 : index
    %242 = vector.load %arg5[%c0_92, %c0_93, %c0_94] : memref<1x1x128xf32, #tpu.memory_space<vmem>>, vector<1x1x128xf32>
    %243 = vector.shape_cast %242 : vector<1x1x128xf32> to vector<1x128xf32>
    %244 = vector.broadcast %243 : vector<1x128xf32> to vector<8x128xf32>
    %245 = arith.addf %241, %244 : vector<8x128xf32>
    %c0_95 = arith.constant 0 : index
    %c0_96 = arith.constant 0 : index
    %246 = vector.load %arg9[%c0_95, %c0_96] : memref<8x128xf32, #tpu.memory_space<vmem>>, vector<8x128xf32>
    tpu.vector_store %arg9[%c0_95, %c0_96], %245 {strides = array<i32>} : memref<8x128xf32, #tpu.memory_space<vmem>>, vector<8x128xf32>,
    %c0_97 = arith.constant 0 : index
    %c0_98 = arith.constant 0 : index
    %c0_99 = arith.constant 0 : index
    %247 = vector.load %arg4[%c0_97, %c0_98, %c0_99] : memref<1x32x128xf32, #tpu.memory_space<vmem>>, vector<1x32x128xf32>
    %248 = vector.shape_cast %247 : vector<1x32x128xf32> to vector<32x128xf32>
    %c1 = arith.constant 1 : index
    %c0_100 = arith.constant 0 : index
    %c0_101 = arith.constant 0 : index
    %249 = vector.load %arg11[%c1, %c0_100, %c0_101] : memref<2x1x32xf32, #tpu.memory_space<vmem>>, vector<1x1x32xf32>
    %250 = vector.shape_cast %249 : vector<1x1x32xf32> to vector<1x32xf32>
    %c1_102 = arith.constant 1 : index
    %c0_103 = arith.constant 0 : index
    %c0_104 = arith.constant 0 : index
    %251 = vector.load %arg12[%c1_102, %c0_103, %c0_104] : memref<2x1x32xf32, #tpu.memory_space<vmem>>, vector<1x1x32xf32>
    %252 = vector.shape_cast %251 : vector<1x1x32xf32> to vector<1x32xf32>
    %c0_i32_105 = arith.constant 0 : i32
    %253 = arith.index_cast %c0_i32_105 : i32 to index
    %c0_106 = arith.constant 0 : index
    %254 = vector.load %arg9[%253, %c0_106] : memref<8x128xf32, #tpu.memory_space<vmem>>, vector<1x128xf32>
    %cst_107 = arith.constant dense<0.000000e+00> : vector<1x128xf32>
    %255 = tpu.matmul %250, %248, %cst_107 {dimension_numbers = #tpu.dot_dimension_numbers<[1], [0], [0], [1], [0, 0, 1, 1], [], []>} : vector<1x32xf32>, vector<32x128xf32>, vector<1x128xf32> -> vector<1x128xf32>
    %256 = arith.addf %254, %255 : vector<1x128xf32>
    %257 = math.tanh %256 : vector<1x128xf32>
    %258 = vector.extract_strided_slice %257 {offsets = [0, 0], sizes = [1, 32], strides = [1, 1]} : vector<1x128xf32> to vector<1x32xf32>
    %cst_108 = arith.constant 1.000000e+00 : f32
    %259 = vector.broadcast %cst_108 : f32 to vector<1x32xf32>
    %260 = arith.addf %258, %259 : vector<1x32xf32>
    %cst_109 = arith.constant 5.000000e-01 : f32
    %261 = vector.broadcast %cst_109 : f32 to vector<1x32xf32>
    %262 = arith.mulf %261, %260 : vector<1x32xf32>
    %263 = vector.extract_strided_slice %257 {offsets = [0, 32], sizes = [1, 32], strides = [1, 1]} : vector<1x128xf32> to vector<1x32xf32>
    %cst_110 = arith.constant 1.000000e+00 : f32
    %264 = vector.broadcast %cst_110 : f32 to vector<1x32xf32>
    %265 = arith.addf %263, %264 : vector<1x32xf32>
    %cst_111 = arith.constant 5.000000e-01 : f32
    %266 = vector.broadcast %cst_111 : f32 to vector<1x32xf32>
    %267 = arith.mulf %266, %265 : vector<1x32xf32>
    %268 = vector.extract_strided_slice %257 {offsets = [0, 64], sizes = [1, 32], strides = [1, 1]} : vector<1x128xf32> to vector<1x32xf32>
    %269 = vector.extract_strided_slice %257 {offsets = [0, 96], sizes = [1, 32], strides = [1, 1]} : vector<1x128xf32> to vector<1x32xf32>
    %cst_112 = arith.constant 1.000000e+00 : f32
    %270 = vector.broadcast %cst_112 : f32 to vector<1x32xf32>
    %271 = arith.addf %269, %270 : vector<1x32xf32>
    %cst_113 = arith.constant 5.000000e-01 : f32
    %272 = vector.broadcast %cst_113 : f32 to vector<1x32xf32>
    %273 = arith.mulf %272, %271 : vector<1x32xf32>
    %274 = arith.mulf %267, %252 : vector<1x32xf32>
    %275 = arith.mulf %262, %268 : vector<1x32xf32>
    %276 = arith.addf %274, %275 : vector<1x32xf32>
    %277 = math.tanh %276 : vector<1x32xf32>
    %278 = arith.mulf %273, %277 : vector<1x32xf32>
    %279 = arith.index_cast %c0_i32_105 : i32 to index
    %c0_114 = arith.constant 0 : index
    %280 = vector.load %arg10[%279, %c0_114] : memref<8x32xf32, #tpu.memory_space<vmem>>, vector<1x32xf32>
    tpu.vector_store %arg10[%279, %c0_114], %278 {strides = array<i32>} : memref<8x32xf32, #tpu.memory_space<vmem>>, vector<1x32xf32>,
    %c1_i32_115 = arith.constant 1 : i32
    %281 = arith.index_cast %c1_i32_115 : i32 to index
    %c0_116 = arith.constant 0 : index
    %282 = vector.load %arg9[%281, %c0_116] : memref<8x128xf32, #tpu.memory_space<vmem>>, vector<1x128xf32>
    %cst_117 = arith.constant dense<0.000000e+00> : vector<1x128xf32>
    %283 = tpu.matmul %278, %248, %cst_117 {dimension_numbers = #tpu.dot_dimension_numbers<[1], [0], [0], [1], [0, 0, 1, 1], [], []>} : vector<1x32xf32>, vector<32x128xf32>, vector<1x128xf32> -> vector<1x128xf32>
    %284 = arith.addf %282, %283 : vector<1x128xf32>
    %285 = math.tanh %284 : vector<1x128xf32>
    %286 = vector.extract_strided_slice %285 {offsets = [0, 0], sizes = [1, 32], strides = [1, 1]} : vector<1x128xf32> to vector<1x32xf32>
    %cst_118 = arith.constant 1.000000e+00 : f32
    %287 = vector.broadcast %cst_118 : f32 to vector<1x32xf32>
    %288 = arith.addf %286, %287 : vector<1x32xf32>
    %cst_119 = arith.constant 5.000000e-01 : f32
    %289 = vector.broadcast %cst_119 : f32 to vector<1x32xf32>
    %290 = arith.mulf %289, %288 : vector<1x32xf32>
    %291 = vector.extract_strided_slice %285 {offsets = [0, 32], sizes = [1, 32], strides = [1, 1]} : vector<1x128xf32> to vector<1x32xf32>
    %cst_120 = arith.constant 1.000000e+00 : f32
    %292 = vector.broadcast %cst_120 : f32 to vector<1x32xf32>
    %293 = arith.addf %291, %292 : vector<1x32xf32>
    %cst_121 = arith.constant 5.000000e-01 : f32
    %294 = vector.broadcast %cst_121 : f32 to vector<1x32xf32>
    %295 = arith.mulf %294, %293 : vector<1x32xf32>
    %296 = vector.extract_strided_slice %285 {offsets = [0, 64], sizes = [1, 32], strides = [1, 1]} : vector<1x128xf32> to vector<1x32xf32>
    %297 = vector.extract_strided_slice %285 {offsets = [0, 96], sizes = [1, 32], strides = [1, 1]} : vector<1x128xf32> to vector<1x32xf32>
    %cst_122 = arith.constant 1.000000e+00 : f32
    %298 = vector.broadcast %cst_122 : f32 to vector<1x32xf32>
    %299 = arith.addf %297, %298 : vector<1x32xf32>
    %cst_123 = arith.constant 5.000000e-01 : f32
    %300 = vector.broadcast %cst_123 : f32 to vector<1x32xf32>
    %301 = arith.mulf %300, %299 : vector<1x32xf32>
    %302 = arith.mulf %295, %276 : vector<1x32xf32>
    %303 = arith.mulf %290, %296 : vector<1x32xf32>
    %304 = arith.addf %302, %303 : vector<1x32xf32>
    %305 = math.tanh %304 : vector<1x32xf32>
    %306 = arith.mulf %301, %305 : vector<1x32xf32>
    %307 = arith.index_cast %c1_i32_115 : i32 to index
    %c0_124 = arith.constant 0 : index
    %308 = vector.load %arg10[%307, %c0_124] : memref<8x32xf32, #tpu.memory_space<vmem>>, vector<1x32xf32>
    tpu.vector_store %arg10[%307, %c0_124], %306 {strides = array<i32>} : memref<8x32xf32, #tpu.memory_space<vmem>>, vector<1x32xf32>,
    %c2_i32_125 = arith.constant 2 : i32
    %309 = arith.index_cast %c2_i32_125 : i32 to index
    %c0_126 = arith.constant 0 : index
    %310 = vector.load %arg9[%309, %c0_126] : memref<8x128xf32, #tpu.memory_space<vmem>>, vector<1x128xf32>
    %cst_127 = arith.constant dense<0.000000e+00> : vector<1x128xf32>
    %311 = tpu.matmul %306, %248, %cst_127 {dimension_numbers = #tpu.dot_dimension_numbers<[1], [0], [0], [1], [0, 0, 1, 1], [], []>} : vector<1x32xf32>, vector<32x128xf32>, vector<1x128xf32> -> vector<1x128xf32>
    %312 = arith.addf %310, %311 : vector<1x128xf32>
    %313 = math.tanh %312 : vector<1x128xf32>
    %314 = vector.extract_strided_slice %313 {offsets = [0, 0], sizes = [1, 32], strides = [1, 1]} : vector<1x128xf32> to vector<1x32xf32>
    %cst_128 = arith.constant 1.000000e+00 : f32
    %315 = vector.broadcast %cst_128 : f32 to vector<1x32xf32>
    %316 = arith.addf %314, %315 : vector<1x32xf32>
    %cst_129 = arith.constant 5.000000e-01 : f32
    %317 = vector.broadcast %cst_129 : f32 to vector<1x32xf32>
    %318 = arith.mulf %317, %316 : vector<1x32xf32>
    %319 = vector.extract_strided_slice %313 {offsets = [0, 32], sizes = [1, 32], strides = [1, 1]} : vector<1x128xf32> to vector<1x32xf32>
    %cst_130 = arith.constant 1.000000e+00 : f32
    %320 = vector.broadcast %cst_130 : f32 to vector<1x32xf32>
    %321 = arith.addf %319, %320 : vector<1x32xf32>
    %cst_131 = arith.constant 5.000000e-01 : f32
    %322 = vector.broadcast %cst_131 : f32 to vector<1x32xf32>
    %323 = arith.mulf %322, %321 : vector<1x32xf32>
    %324 = vector.extract_strided_slice %313 {offsets = [0, 64], sizes = [1, 32], strides = [1, 1]} : vector<1x128xf32> to vector<1x32xf32>
    %325 = vector.extract_strided_slice %313 {offsets = [0, 96], sizes = [1, 32], strides = [1, 1]} : vector<1x128xf32> to vector<1x32xf32>
    %cst_132 = arith.constant 1.000000e+00 : f32
    %326 = vector.broadcast %cst_132 : f32 to vector<1x32xf32>
    %327 = arith.addf %325, %326 : vector<1x32xf32>
    %cst_133 = arith.constant 5.000000e-01 : f32
    %328 = vector.broadcast %cst_133 : f32 to vector<1x32xf32>
    %329 = arith.mulf %328, %327 : vector<1x32xf32>
    %330 = arith.mulf %323, %304 : vector<1x32xf32>
    %331 = arith.mulf %318, %324 : vector<1x32xf32>
    %332 = arith.addf %330, %331 : vector<1x32xf32>
    %333 = math.tanh %332 : vector<1x32xf32>
    %334 = arith.mulf %329, %333 : vector<1x32xf32>
    %335 = arith.index_cast %c2_i32_125 : i32 to index
    %c0_134 = arith.constant 0 : index
    %336 = vector.load %arg10[%335, %c0_134] : memref<8x32xf32, #tpu.memory_space<vmem>>, vector<1x32xf32>
    tpu.vector_store %arg10[%335, %c0_134], %334 {strides = array<i32>} : memref<8x32xf32, #tpu.memory_space<vmem>>, vector<1x32xf32>,
    %c3_i32_135 = arith.constant 3 : i32
    %337 = arith.index_cast %c3_i32_135 : i32 to index
    %c0_136 = arith.constant 0 : index
    %338 = vector.load %arg9[%337, %c0_136] : memref<8x128xf32, #tpu.memory_space<vmem>>, vector<1x128xf32>
    %cst_137 = arith.constant dense<0.000000e+00> : vector<1x128xf32>
    %339 = tpu.matmul %334, %248, %cst_137 {dimension_numbers = #tpu.dot_dimension_numbers<[1], [0], [0], [1], [0, 0, 1, 1], [], []>} : vector<1x32xf32>, vector<32x128xf32>, vector<1x128xf32> -> vector<1x128xf32>
    %340 = arith.addf %338, %339 : vector<1x128xf32>
    %341 = math.tanh %340 : vector<1x128xf32>
    %342 = vector.extract_strided_slice %341 {offsets = [0, 0], sizes = [1, 32], strides = [1, 1]} : vector<1x128xf32> to vector<1x32xf32>
    %cst_138 = arith.constant 1.000000e+00 : f32
    %343 = vector.broadcast %cst_138 : f32 to vector<1x32xf32>
    %344 = arith.addf %342, %343 : vector<1x32xf32>
    %cst_139 = arith.constant 5.000000e-01 : f32
    %345 = vector.broadcast %cst_139 : f32 to vector<1x32xf32>
    %346 = arith.mulf %345, %344 : vector<1x32xf32>
    %347 = vector.extract_strided_slice %341 {offsets = [0, 32], sizes = [1, 32], strides = [1, 1]} : vector<1x128xf32> to vector<1x32xf32>
    %cst_140 = arith.constant 1.000000e+00 : f32
    %348 = vector.broadcast %cst_140 : f32 to vector<1x32xf32>
    %349 = arith.addf %347, %348 : vector<1x32xf32>
    %cst_141 = arith.constant 5.000000e-01 : f32
    %350 = vector.broadcast %cst_141 : f32 to vector<1x32xf32>
    %351 = arith.mulf %350, %349 : vector<1x32xf32>
    %352 = vector.extract_strided_slice %341 {offsets = [0, 64], sizes = [1, 32], strides = [1, 1]} : vector<1x128xf32> to vector<1x32xf32>
    %353 = vector.extract_strided_slice %341 {offsets = [0, 96], sizes = [1, 32], strides = [1, 1]} : vector<1x128xf32> to vector<1x32xf32>
    %cst_142 = arith.constant 1.000000e+00 : f32
    %354 = vector.broadcast %cst_142 : f32 to vector<1x32xf32>
    %355 = arith.addf %353, %354 : vector<1x32xf32>
    %cst_143 = arith.constant 5.000000e-01 : f32
    %356 = vector.broadcast %cst_143 : f32 to vector<1x32xf32>
    %357 = arith.mulf %356, %355 : vector<1x32xf32>
    %358 = arith.mulf %351, %332 : vector<1x32xf32>
    %359 = arith.mulf %346, %352 : vector<1x32xf32>
    %360 = arith.addf %358, %359 : vector<1x32xf32>
    %361 = math.tanh %360 : vector<1x32xf32>
    %362 = arith.mulf %357, %361 : vector<1x32xf32>
    %363 = arith.index_cast %c3_i32_135 : i32 to index
    %c0_144 = arith.constant 0 : index
    %364 = vector.load %arg10[%363, %c0_144] : memref<8x32xf32, #tpu.memory_space<vmem>>, vector<1x32xf32>
    tpu.vector_store %arg10[%363, %c0_144], %362 {strides = array<i32>} : memref<8x32xf32, #tpu.memory_space<vmem>>, vector<1x32xf32>,
    %c4_i32_145 = arith.constant 4 : i32
    %365 = arith.index_cast %c4_i32_145 : i32 to index
    %c0_146 = arith.constant 0 : index
    %366 = vector.load %arg9[%365, %c0_146] : memref<8x128xf32, #tpu.memory_space<vmem>>, vector<1x128xf32>
    %cst_147 = arith.constant dense<0.000000e+00> : vector<1x128xf32>
    %367 = tpu.matmul %362, %248, %cst_147 {dimension_numbers = #tpu.dot_dimension_numbers<[1], [0], [0], [1], [0, 0, 1, 1], [], []>} : vector<1x32xf32>, vector<32x128xf32>, vector<1x128xf32> -> vector<1x128xf32>
    %368 = arith.addf %366, %367 : vector<1x128xf32>
    %369 = math.tanh %368 : vector<1x128xf32>
    %370 = vector.extract_strided_slice %369 {offsets = [0, 0], sizes = [1, 32], strides = [1, 1]} : vector<1x128xf32> to vector<1x32xf32>
    %cst_148 = arith.constant 1.000000e+00 : f32
    %371 = vector.broadcast %cst_148 : f32 to vector<1x32xf32>
    %372 = arith.addf %370, %371 : vector<1x32xf32>
    %cst_149 = arith.constant 5.000000e-01 : f32
    %373 = vector.broadcast %cst_149 : f32 to vector<1x32xf32>
    %374 = arith.mulf %373, %372 : vector<1x32xf32>
    %375 = vector.extract_strided_slice %369 {offsets = [0, 32], sizes = [1, 32], strides = [1, 1]} : vector<1x128xf32> to vector<1x32xf32>
    %cst_150 = arith.constant 1.000000e+00 : f32
    %376 = vector.broadcast %cst_150 : f32 to vector<1x32xf32>
    %377 = arith.addf %375, %376 : vector<1x32xf32>
    %cst_151 = arith.constant 5.000000e-01 : f32
    %378 = vector.broadcast %cst_151 : f32 to vector<1x32xf32>
    %379 = arith.mulf %378, %377 : vector<1x32xf32>
    %380 = vector.extract_strided_slice %369 {offsets = [0, 64], sizes = [1, 32], strides = [1, 1]} : vector<1x128xf32> to vector<1x32xf32>
    %381 = vector.extract_strided_slice %369 {offsets = [0, 96], sizes = [1, 32], strides = [1, 1]} : vector<1x128xf32> to vector<1x32xf32>
    %cst_152 = arith.constant 1.000000e+00 : f32
    %382 = vector.broadcast %cst_152 : f32 to vector<1x32xf32>
    %383 = arith.addf %381, %382 : vector<1x32xf32>
    %cst_153 = arith.constant 5.000000e-01 : f32
    %384 = vector.broadcast %cst_153 : f32 to vector<1x32xf32>
    %385 = arith.mulf %384, %383 : vector<1x32xf32>
    %386 = arith.mulf %379, %360 : vector<1x32xf32>
    %387 = arith.mulf %374, %380 : vector<1x32xf32>
    %388 = arith.addf %386, %387 : vector<1x32xf32>
    %389 = math.tanh %388 : vector<1x32xf32>
    %390 = arith.mulf %385, %389 : vector<1x32xf32>
    %391 = arith.index_cast %c4_i32_145 : i32 to index
    %c0_154 = arith.constant 0 : index
    %392 = vector.load %arg10[%391, %c0_154] : memref<8x32xf32, #tpu.memory_space<vmem>>, vector<1x32xf32>
    tpu.vector_store %arg10[%391, %c0_154], %390 {strides = array<i32>} : memref<8x32xf32, #tpu.memory_space<vmem>>, vector<1x32xf32>,
    %c5_i32_155 = arith.constant 5 : i32
    %393 = arith.index_cast %c5_i32_155 : i32 to index
    %c0_156 = arith.constant 0 : index
    %394 = vector.load %arg9[%393, %c0_156] : memref<8x128xf32, #tpu.memory_space<vmem>>, vector<1x128xf32>
    %cst_157 = arith.constant dense<0.000000e+00> : vector<1x128xf32>
    %395 = tpu.matmul %390, %248, %cst_157 {dimension_numbers = #tpu.dot_dimension_numbers<[1], [0], [0], [1], [0, 0, 1, 1], [], []>} : vector<1x32xf32>, vector<32x128xf32>, vector<1x128xf32> -> vector<1x128xf32>
    %396 = arith.addf %394, %395 : vector<1x128xf32>
    %397 = math.tanh %396 : vector<1x128xf32>
    %398 = vector.extract_strided_slice %397 {offsets = [0, 0], sizes = [1, 32], strides = [1, 1]} : vector<1x128xf32> to vector<1x32xf32>
    %cst_158 = arith.constant 1.000000e+00 : f32
    %399 = vector.broadcast %cst_158 : f32 to vector<1x32xf32>
    %400 = arith.addf %398, %399 : vector<1x32xf32>
    %cst_159 = arith.constant 5.000000e-01 : f32
    %401 = vector.broadcast %cst_159 : f32 to vector<1x32xf32>
    %402 = arith.mulf %401, %400 : vector<1x32xf32>
    %403 = vector.extract_strided_slice %397 {offsets = [0, 32], sizes = [1, 32], strides = [1, 1]} : vector<1x128xf32> to vector<1x32xf32>
    %cst_160 = arith.constant 1.000000e+00 : f32
    %404 = vector.broadcast %cst_160 : f32 to vector<1x32xf32>
    %405 = arith.addf %403, %404 : vector<1x32xf32>
    %cst_161 = arith.constant 5.000000e-01 : f32
    %406 = vector.broadcast %cst_161 : f32 to vector<1x32xf32>
    %407 = arith.mulf %406, %405 : vector<1x32xf32>
    %408 = vector.extract_strided_slice %397 {offsets = [0, 64], sizes = [1, 32], strides = [1, 1]} : vector<1x128xf32> to vector<1x32xf32>
    %409 = vector.extract_strided_slice %397 {offsets = [0, 96], sizes = [1, 32], strides = [1, 1]} : vector<1x128xf32> to vector<1x32xf32>
    %cst_162 = arith.constant 1.000000e+00 : f32
    %410 = vector.broadcast %cst_162 : f32 to vector<1x32xf32>
    %411 = arith.addf %409, %410 : vector<1x32xf32>
    %cst_163 = arith.constant 5.000000e-01 : f32
    %412 = vector.broadcast %cst_163 : f32 to vector<1x32xf32>
    %413 = arith.mulf %412, %411 : vector<1x32xf32>
    %414 = arith.mulf %407, %388 : vector<1x32xf32>
    %415 = arith.mulf %402, %408 : vector<1x32xf32>
    %416 = arith.addf %414, %415 : vector<1x32xf32>
    %417 = math.tanh %416 : vector<1x32xf32>
    %418 = arith.mulf %413, %417 : vector<1x32xf32>
    %419 = arith.index_cast %c5_i32_155 : i32 to index
    %c0_164 = arith.constant 0 : index
    %420 = vector.load %arg10[%419, %c0_164] : memref<8x32xf32, #tpu.memory_space<vmem>>, vector<1x32xf32>
    tpu.vector_store %arg10[%419, %c0_164], %418 {strides = array<i32>} : memref<8x32xf32, #tpu.memory_space<vmem>>, vector<1x32xf32>,
    %c6_i32_165 = arith.constant 6 : i32
    %421 = arith.index_cast %c6_i32_165 : i32 to index
    %c0_166 = arith.constant 0 : index
    %422 = vector.load %arg9[%421, %c0_166] : memref<8x128xf32, #tpu.memory_space<vmem>>, vector<1x128xf32>
    %cst_167 = arith.constant dense<0.000000e+00> : vector<1x128xf32>
    %423 = tpu.matmul %418, %248, %cst_167 {dimension_numbers = #tpu.dot_dimension_numbers<[1], [0], [0], [1], [0, 0, 1, 1], [], []>} : vector<1x32xf32>, vector<32x128xf32>, vector<1x128xf32> -> vector<1x128xf32>
    %424 = arith.addf %422, %423 : vector<1x128xf32>
    %425 = math.tanh %424 : vector<1x128xf32>
    %426 = vector.extract_strided_slice %425 {offsets = [0, 0], sizes = [1, 32], strides = [1, 1]} : vector<1x128xf32> to vector<1x32xf32>
    %cst_168 = arith.constant 1.000000e+00 : f32
    %427 = vector.broadcast %cst_168 : f32 to vector<1x32xf32>
    %428 = arith.addf %426, %427 : vector<1x32xf32>
    %cst_169 = arith.constant 5.000000e-01 : f32
    %429 = vector.broadcast %cst_169 : f32 to vector<1x32xf32>
    %430 = arith.mulf %429, %428 : vector<1x32xf32>
    %431 = vector.extract_strided_slice %425 {offsets = [0, 32], sizes = [1, 32], strides = [1, 1]} : vector<1x128xf32> to vector<1x32xf32>
    %cst_170 = arith.constant 1.000000e+00 : f32
    %432 = vector.broadcast %cst_170 : f32 to vector<1x32xf32>
    %433 = arith.addf %431, %432 : vector<1x32xf32>
    %cst_171 = arith.constant 5.000000e-01 : f32
    %434 = vector.broadcast %cst_171 : f32 to vector<1x32xf32>
    %435 = arith.mulf %434, %433 : vector<1x32xf32>
    %436 = vector.extract_strided_slice %425 {offsets = [0, 64], sizes = [1, 32], strides = [1, 1]} : vector<1x128xf32> to vector<1x32xf32>
    %437 = vector.extract_strided_slice %425 {offsets = [0, 96], sizes = [1, 32], strides = [1, 1]} : vector<1x128xf32> to vector<1x32xf32>
    %cst_172 = arith.constant 1.000000e+00 : f32
    %438 = vector.broadcast %cst_172 : f32 to vector<1x32xf32>
    %439 = arith.addf %437, %438 : vector<1x32xf32>
    %cst_173 = arith.constant 5.000000e-01 : f32
    %440 = vector.broadcast %cst_173 : f32 to vector<1x32xf32>
    %441 = arith.mulf %440, %439 : vector<1x32xf32>
    %442 = arith.mulf %435, %416 : vector<1x32xf32>
    %443 = arith.mulf %430, %436 : vector<1x32xf32>
    %444 = arith.addf %442, %443 : vector<1x32xf32>
    %445 = math.tanh %444 : vector<1x32xf32>
    %446 = arith.mulf %441, %445 : vector<1x32xf32>
    %447 = arith.index_cast %c6_i32_165 : i32 to index
    %c0_174 = arith.constant 0 : index
    %448 = vector.load %arg10[%447, %c0_174] : memref<8x32xf32, #tpu.memory_space<vmem>>, vector<1x32xf32>
    tpu.vector_store %arg10[%447, %c0_174], %446 {strides = array<i32>} : memref<8x32xf32, #tpu.memory_space<vmem>>, vector<1x32xf32>,
    %c7_i32_175 = arith.constant 7 : i32
    %449 = arith.index_cast %c7_i32_175 : i32 to index
    %c0_176 = arith.constant 0 : index
    %450 = vector.load %arg9[%449, %c0_176] : memref<8x128xf32, #tpu.memory_space<vmem>>, vector<1x128xf32>
    %cst_177 = arith.constant dense<0.000000e+00> : vector<1x128xf32>
    %451 = tpu.matmul %446, %248, %cst_177 {dimension_numbers = #tpu.dot_dimension_numbers<[1], [0], [0], [1], [0, 0, 1, 1], [], []>} : vector<1x32xf32>, vector<32x128xf32>, vector<1x128xf32> -> vector<1x128xf32>
    %452 = arith.addf %450, %451 : vector<1x128xf32>
    %453 = math.tanh %452 : vector<1x128xf32>
    %454 = vector.extract_strided_slice %453 {offsets = [0, 0], sizes = [1, 32], strides = [1, 1]} : vector<1x128xf32> to vector<1x32xf32>
    %cst_178 = arith.constant 1.000000e+00 : f32
    %455 = vector.broadcast %cst_178 : f32 to vector<1x32xf32>
    %456 = arith.addf %454, %455 : vector<1x32xf32>
    %cst_179 = arith.constant 5.000000e-01 : f32
    %457 = vector.broadcast %cst_179 : f32 to vector<1x32xf32>
    %458 = arith.mulf %457, %456 : vector<1x32xf32>
    %459 = vector.extract_strided_slice %453 {offsets = [0, 32], sizes = [1, 32], strides = [1, 1]} : vector<1x128xf32> to vector<1x32xf32>
    %cst_180 = arith.constant 1.000000e+00 : f32
    %460 = vector.broadcast %cst_180 : f32 to vector<1x32xf32>
    %461 = arith.addf %459, %460 : vector<1x32xf32>
    %cst_181 = arith.constant 5.000000e-01 : f32
    %462 = vector.broadcast %cst_181 : f32 to vector<1x32xf32>
    %463 = arith.mulf %462, %461 : vector<1x32xf32>
    %464 = vector.extract_strided_slice %453 {offsets = [0, 64], sizes = [1, 32], strides = [1, 1]} : vector<1x128xf32> to vector<1x32xf32>
    %465 = vector.extract_strided_slice %453 {offsets = [0, 96], sizes = [1, 32], strides = [1, 1]} : vector<1x128xf32> to vector<1x32xf32>
    %cst_182 = arith.constant 1.000000e+00 : f32
    %466 = vector.broadcast %cst_182 : f32 to vector<1x32xf32>
    %467 = arith.addf %465, %466 : vector<1x32xf32>
    %cst_183 = arith.constant 5.000000e-01 : f32
    %468 = vector.broadcast %cst_183 : f32 to vector<1x32xf32>
    %469 = arith.mulf %468, %467 : vector<1x32xf32>
    %470 = arith.mulf %463, %444 : vector<1x32xf32>
    %471 = arith.mulf %458, %464 : vector<1x32xf32>
    %472 = arith.addf %470, %471 : vector<1x32xf32>
    %473 = math.tanh %472 : vector<1x32xf32>
    %474 = arith.mulf %469, %473 : vector<1x32xf32>
    %475 = arith.index_cast %c7_i32_175 : i32 to index
    %c0_184 = arith.constant 0 : index
    %476 = vector.load %arg10[%475, %c0_184] : memref<8x32xf32, #tpu.memory_space<vmem>>, vector<1x32xf32>
    tpu.vector_store %arg10[%475, %c0_184], %474 {strides = array<i32>} : memref<8x32xf32, #tpu.memory_space<vmem>>, vector<1x32xf32>,
    %c8_i32_185 = arith.constant 8 : i32
    %c1_186 = arith.constant 1 : index
    %c0_187 = arith.constant 0 : index
    %c0_188 = arith.constant 0 : index
    %477 = vector.load %arg11[%c1_186, %c0_187, %c0_188] : memref<2x1x32xf32, #tpu.memory_space<vmem>>, vector<1x1x32xf32>
    %478 = vector.shape_cast %477 : vector<1x1x32xf32> to vector<1x32xf32>
    %479 = vector.shape_cast %474 : vector<1x32xf32> to vector<1x1x32xf32>
    tpu.vector_store %arg11[%c1_186, %c0_187, %c0_188], %479 {strides = array<i32>} : memref<2x1x32xf32, #tpu.memory_space<vmem>>, vector<1x1x32xf32>,
    %c1_189 = arith.constant 1 : index
    %c0_190 = arith.constant 0 : index
    %c0_191 = arith.constant 0 : index
    %480 = vector.load %arg12[%c1_189, %c0_190, %c0_191] : memref<2x1x32xf32, #tpu.memory_space<vmem>>, vector<1x1x32xf32>
    %481 = vector.shape_cast %480 : vector<1x1x32xf32> to vector<1x32xf32>
    %482 = vector.shape_cast %472 : vector<1x32xf32> to vector<1x1x32xf32>
    tpu.vector_store %arg12[%c1_189, %c0_190, %c0_191], %482 {strides = array<i32>} : memref<2x1x32xf32, #tpu.memory_space<vmem>>, vector<1x1x32xf32>,
    %c0_192 = arith.constant 0 : index
    %c0_193 = arith.constant 0 : index
    %483 = vector.load %arg10[%c0_192, %c0_193] : memref<8x32xf32, #tpu.memory_space<vmem>>, vector<8x32xf32>
    %c0_194 = arith.constant 0 : index
    %c0_195 = arith.constant 0 : index
    %484 = vector.load %arg6[%c0_194, %c0_195] : memref<32x128xf32, #tpu.memory_space<vmem>>, vector<32x128xf32>
    %cst_196 = arith.constant dense<0.000000e+00> : vector<8x128xf32>
    %485 = tpu.matmul %483, %484, %cst_196 {dimension_numbers = #tpu.dot_dimension_numbers<[1], [0], [0], [1], [0, 0, 1, 1], [], []>} : vector<8x32xf32>, vector<32x128xf32>, vector<8x128xf32> -> vector<8x128xf32>
    %c0_197 = arith.constant 0 : index
    %c0_198 = arith.constant 0 : index
    %486 = vector.load %arg7[%c0_197, %c0_198] : memref<1x128xf32, #tpu.memory_space<vmem>>, vector<1x128xf32>
    %487 = vector.broadcast %486 : vector<1x128xf32> to vector<8x128xf32>
    %488 = arith.addf %485, %487 : vector<8x128xf32>
    %c0_199 = arith.constant 0 : index
    %c0_200 = arith.constant 0 : index
    %489 = vector.load %arg8[%c0_199, %c0_200] : memref<8x128xf32, #tpu.memory_space<vmem>>, vector<8x128xf32>
    tpu.vector_store %arg8[%c0_199, %c0_200], %488 {strides = array<i32>} : memref<8x128xf32, #tpu.memory_space<vmem>>, vector<8x128xf32>,
    return
  }
  func.func @transform_0(%arg0: i32) -> (i32, i32) {
    %c0_i32 = arith.constant 0 : i32
    %c0_i32_0 = arith.constant 0 : i32
    return %arg0, %c0_i32 : i32, i32
  }
  func.func @transform_1(%arg0: i32) -> (i32, i32) {
    %c0_i32 = arith.constant 0 : i32
    %c0_i32_0 = arith.constant 0 : i32
    %c0_i32_1 = arith.constant 0 : i32
    return %c0_i32, %c0_i32_0 : i32, i32
  }
  func.func @transform_2(%arg0: i32) -> (i32, i32, i32) {
    %c0_i32 = arith.constant 0 : i32
    %c0_i32_0 = arith.constant 0 : i32
    %c0_i32_1 = arith.constant 0 : i32
    %c0_i32_2 = arith.constant 0 : i32
    return %c0_i32, %c0_i32_0, %c0_i32_1 : i32, i32, i32
  }
  func.func @transform_3(%arg0: i32) -> (i32, i32, i32) {
    %c0_i32 = arith.constant 0 : i32
    %c0_i32_0 = arith.constant 0 : i32
    %c0_i32_1 = arith.constant 0 : i32
    %c0_i32_2 = arith.constant 0 : i32
    return %c0_i32, %c0_i32_0, %c0_i32_1 : i32, i32, i32
  }
  func.func @transform_4(%arg0: i32) -> (i32, i32, i32) {
    %c0_i32 = arith.constant 0 : i32
    %c0_i32_0 = arith.constant 0 : i32
    %c0_i32_1 = arith.constant 0 : i32
    %c0_i32_2 = arith.constant 0 : i32
    return %c0_i32, %c0_i32_0, %c0_i32_1 : i32, i32, i32
  }
  func.func @transform_5(%arg0: i32) -> (i32, i32) {
    %c0_i32 = arith.constant 0 : i32
    %c0_i32_0 = arith.constant 0 : i32
    %c0_i32_1 = arith.constant 0 : i32
    return %c0_i32, %c0_i32_0 : i32, i32
  }
  func.func @transform_6(%arg0: i32) -> (i32, i32) {
    %c0_i32 = arith.constant 0 : i32
    %c0_i32_0 = arith.constant 0 : i32
    %c0_i32_1 = arith.constant 0 : i32
    return %c0_i32, %c0_i32_0 : i32, i32
  }
  func.func @transform_7(%arg0: i32) -> (i32, i32) {
    %c0_i32 = arith.constant 0 : i32
    %c0_i32_0 = arith.constant 0 : i32
    return %arg0, %c0_i32 : i32, i32
  }
}

</mosaic_0001>

<llo_original>
// kernel: tpu_custom_call.1
$region0: #{tpu_custom_call.1}
  #allocation0 [shape = 'u32[]', space=smem, size = 0x4, offset = 0x4, fixed_abs, tag = 'smem constant byte address 0x4 - core index']
  #allocation1 [shape = 'u32[144,128]{1,0:T(1,128)}', space=vmem, size = 0x12000, scoped, tag = 'internal scratch']
  #allocation2 [shape = 'f32[8,128]{1,0:T(8,128)}', space=vmem, size = 0x1000, scoped, tag = 'scratch operand']
  #allocation3 [shape = 'f32[8,32]{1,0:T(8,128)}', space=vmem, size = 0x1000, scoped, tag = 'scratch operand']
  #allocation4 [shape = 'f32[2,1,32]{2,1,0:T(1,128)}', space=vmem, size = 0x400, scoped, tag = 'scratch operand']
  #allocation5 [shape = 'f32[2,1,32]{2,1,0:T(1,128)}', space=vmem, size = 0x400, scoped, tag = 'scratch operand']
  %s0 = inlined_call_operand.hbm [shape: f32[8,128], index: 0, kind: input, shape index: {}]
  %s1 = inlined_call_operand.hbm [shape: f32[32,128], index: 1, kind: input, shape index: {}]
  %s2 = inlined_call_operand.hbm [shape: f32[1,32,128], index: 2, kind: input, shape index: {}]
  %s3 = inlined_call_operand.hbm [shape: f32[1,32,128], index: 3, kind: input, shape index: {}]
  %s4 = inlined_call_operand.vmem [shape: f32[1,1,128], index: 4, kind: input, shape index: {}]
  %s5 = inlined_call_operand.hbm [shape: f32[32,128], index: 5, kind: input, shape index: {}]
  %s6 = inlined_call_operand.vmem [shape: f32[1,128], index: 6, kind: input, shape index: {}]
  %s7 = inlined_call_operand.hbm [shape: f32[8,128], index: 7, kind: output, shape index: {}]
  %s8 = sld [smem:[#allocation0]]
  $region62: #{tpu_custom_call.1} parent=0
    _
  %s10 = ssub.s32 1, %s8
  %s11 = scalar_select 0, %s10, %s8
  $region1: #{tpu_custom_call.1} parent=0
    #allocation6 [shape = 'u8[4096]{0}', space=vmem, size = 0x1000, scoped, tag = 'input window, operand 0, single buffered']
    #allocation7 [shape = 's32[1]{0}', space=sflag, size = 0x4, scoped, tag = 'scoped memory for tpu_custom_call.1']
    #allocation8 [shape = 's32[1]{0}', space=sflag, size = 0x4, scoped, tag = 'scoped memory for tpu_custom_call.1']
    #allocation9 [shape = 'u8[16384]{0}', space=vmem, size = 0x4000, scoped, tag = 'input window, operand 1, single buffered']
    #allocation10 [shape = 's32[1]{0}', space=sflag, size = 0x4, scoped, tag = 'scoped memory for tpu_custom_call.1']
    #allocation11 [shape = 'u8[16384]{0}', space=vmem, size = 0x4000, scoped, tag = 'input window, operand 2, single buffered']
    #allocation12 [shape = 'u8[16384]{0}', space=vmem, size = 0x4000, scoped, tag = 'input window, operand 3, single buffered']
    #allocation13 [shape = 's32[1]{0}', space=sflag, size = 0x4, scoped, tag = 'scoped memory for tpu_custom_call.1']
    #allocation14 [shape = 'u8[16384]{0}', space=vmem, size = 0x4000, scoped, tag = 'input window, operand 5, single buffered']
    #allocation15 [shape = 'u8[4096]{0}', space=vmem, size = 0x1000, scoped, tag = 'output window, operand 0, single buffered']
    %12 = vsyncpa [#allocation7], 0
    %13 = vsyncpa [#allocation10], 0
    %14 = vsyncpa [#allocation13], 0
    %15 = vsyncpa [#allocation8], 0
    // Predicated region
    $region2: #{tpu_custom_call.1} parent=1 // pred_check
      _
    $region3: #{tpu_custom_call.1} parent=1 // pred_check_branch
      %17 = sbr.rel (0) target = $region5
    $region4: #{tpu_custom_call.1} parent=1 // pred_region
      %s19 = ssub.s32 128, 128
      %20 = vsyncadd [#allocation7], %s19
      %s22 = sshll.u32 [#allocation6], 4
      %s23 = int_to_ptr.vmem [resolvable:$true] %s22
      %25 = dma.hbm_to_vmem [thread:$0]  %s0, 128, %s23, [#allocation7]
    $region5: #{tpu_custom_call.1} parent=1 // pred_fallthru
      _
    // Predicated region
    $region6: #{tpu_custom_call.1} parent=1 // pred_check
      _
    $region7: #{tpu_custom_call.1} parent=1 // pred_check_branch
      %27 = sbr.rel (0) target = $region9
    $region8: #{tpu_custom_call.1} parent=1 // pred_region
      %s29 = ssub.s32 512, 512
      %30 = vsyncadd [#allocation10], %s29
      %s31 = sshll.u32 [#allocation9], 4
      %s32 = int_to_ptr.vmem [resolvable:$true] %s31
      %37 = dma.hbm_to_vmem [thread:$0]  %s1, 512, %s32, [#allocation10], 128, 128, 8
    $region9: #{tpu_custom_call.1} parent=1 // pred_fallthru
      _
    // Predicated region
    $region10: #{tpu_custom_call.1} parent=1 // pred_check
      _
    $region11: #{tpu_custom_call.1} parent=1 // pred_check_branch
      %39 = sbr.rel (0) target = $region13
    $region12: #{tpu_custom_call.1} parent=1 // pred_region
      %s41 = ssub.s32 512, 512
      %42 = vsyncadd [#allocation10], %s41
      %s43 = sshll.u32 [#allocation11], 4
      %s44 = int_to_ptr.vmem [resolvable:$true] %s43
      %49 = dma.hbm_to_vmem [thread:$0]  %s2, 512, %s44, [#allocation10], 128, 128, 8
    $region13: #{tpu_custom_call.1} parent=1 // pred_fallthru
      _
    // Predicated region
    $region14: #{tpu_custom_call.1} parent=1 // pred_check
      _
    $region15: #{tpu_custom_call.1} parent=1 // pred_check_branch
      %51 = sbr.rel (0) target = $region17
    $region16: #{tpu_custom_call.1} parent=1 // pred_region
      %s53 = ssub.s32 512, 512
      %54 = vsyncadd [#allocation13], %s53
      %s55 = sshll.u32 [#allocation12], 4
      %s56 = int_to_ptr.vmem [resolvable:$true] %s55
      %61 = dma.hbm_to_vmem [thread:$0]  %s3, 512, %s56, [#allocation13], 128, 128, 8
    $region17: #{tpu_custom_call.1} parent=1 // pred_fallthru
      _
    // Predicated region
    $region18: #{tpu_custom_call.1} parent=1 // pred_check
      _
    $region19: #{tpu_custom_call.1} parent=1 // pred_check_branch
      %63 = sbr.rel (0) target = $region21
    $region20: #{tpu_custom_call.1} parent=1 // pred_region
      _
    $region21: #{tpu_custom_call.1} parent=1 // pred_fallthru
      _
    // Predicated region
    $region22: #{tpu_custom_call.1} parent=1 // pred_check
      _
    $region23: #{tpu_custom_call.1} parent=1 // pred_check_branch
      %65 = sbr.rel (0) target = $region25
    $region24: #{tpu_custom_call.1} parent=1 // pred_region
      %s67 = ssub.s32 512, 512
      %68 = vsyncadd [#allocation13], %s67
      %s69 = sshll.u32 [#allocation14], 4
      %s70 = int_to_ptr.vmem [resolvable:$true] %s69
      %75 = dma.hbm_to_vmem [thread:$0]  %s5, 512, %s70, [#allocation13], 128, 128, 8
    $region25: #{tpu_custom_call.1} parent=1 // pred_fallthru
      _
    // Predicated region
    $region26: #{tpu_custom_call.1} parent=1 // pred_check
      _
    $region27: #{tpu_custom_call.1} parent=1 // pred_check_branch
      %77 = sbr.rel (0) target = $region29
    $region28: #{tpu_custom_call.1} parent=1 // pred_region
      _
    $region29: #{tpu_custom_call.1} parent=1 // pred_fallthru
      _
    // Predicated region
    $region30: #{tpu_custom_call.1} parent=1 // pred_check
      _
    $region31: #{tpu_custom_call.1} parent=1 // pred_check_branch
      %79 = sbr.rel (0) target = $region33
    $region32: #{tpu_custom_call.1} parent=1 // pred_region
      %80 = dma.done [#allocation7], 128
    $region33: #{tpu_custom_call.1} parent=1 // pred_fallthru
      _
    // Predicated region
    $region34: #{tpu_custom_call.1} parent=1 // pred_check
      _
    $region35: #{tpu_custom_call.1} parent=1 // pred_check_branch
      %82 = sbr.rel (0) target = $region37
    $region36: #{tpu_custom_call.1} parent=1 // pred_region
      %83 = dma.done [#allocation10], 512
    $region37: #{tpu_custom_call.1} parent=1 // pred_fallthru
      _
    // Predicated region
    $region38: #{tpu_custom_call.1} parent=1 // pred_check
      _
    $region39: #{tpu_custom_call.1} parent=1 // pred_check_branch
      %85 = sbr.rel (0) target = $region41
    $region40: #{tpu_custom_call.1} parent=1 // pred_region
      %86 = dma.done [#allocation10], 512
    $region41: #{tpu_custom_call.1} parent=1 // pred_fallthru
      _
    // Predicated region
    $region42: #{tpu_custom_call.1} parent=1 // pred_check
      _
    $region43: #{tpu_custom_call.1} parent=1 // pred_check_branch
      %88 = sbr.rel (0) target = $region45
    $region44: #{tpu_custom_call.1} parent=1 // pred_region
      %89 = dma.done [#allocation13], 512
    $region45: #{tpu_custom_call.1} parent=1 // pred_fallthru
      _
    // Predicated region
    $region46: #{tpu_custom_call.1} parent=1 // pred_check
      _
    $region47: #{tpu_custom_call.1} parent=1 // pred_check_branch
      %91 = sbr.rel (0) target = $region49
    $region48: #{tpu_custom_call.1} parent=1 // pred_region
      %92 = dma.done [#allocation13], 512
    $region49: #{tpu_custom_call.1} parent=1 // pred_fallthru
      _
    %p93 = scmp.eq.s32.totalorder 0, 0
    // Predicated region
    $region50: #{tpu_custom_call.1} parent=1 // pred_check
      %p94 = pneg %p93
    $region51: #{tpu_custom_call.1} parent=1 // pred_check_branch
      %96 = sbr.rel (%p94) target = $region53
    $region52: #{tpu_custom_call.1} parent=1 // pred_region
      %vm97 = vcmask 253952
      %98 = vst.msk [vmem:[#allocation4] sm:$0x1] %vm97, 0.0
      %99 = vst.msk [vmem:[#allocation4 + $0x1] sm:$0x1] %vm97, 0.0
      %100 = vst.msk [vmem:[#allocation5] sm:$0x1] %vm97, 0.0
      %101 = vst.msk [vmem:[#allocation5 + $0x1] sm:$0x1] %vm97, 0.0
    $region53: #{tpu_custom_call.1} parent=1 // pred_fallthru
      _
    %v102 = vld [vmem:[#allocation9] sm:$0xff]
    %v103 = vld [vmem:[#allocation9 + $0x8] sm:$0xff]
    %v104 = vld [vmem:[#allocation9 + $0x10] sm:$0xff]
    %v105 = vld [vmem:[#allocation9 + $0x18] sm:$0xff]
    %v106 = vld [vmem:[#allocation4] sm:$0x1]
    %v107 = vld [vmem:[#allocation5] sm:$0x1]
    %v108 = vld [vmem:[#allocation6] sm:$0x1]
    %vm109 = vcmask 261120
    %v111 = vsel %vm109, %v106, 0
    %113 = vmatprep.subr.mxu0 0.0
    %114 = vmatpush1.msra.mxu0 %v102
    %115 = vmatprep.subr.mxu0 0.0
    %116 = vmatpush1.msra.mxu0 %v103
    %117 = vmatprep.subr.mxu0 0.0
    %118 = vmatpush1.msra.mxu0 %v104
    %119 = vmatprep.subr.mxu0 0.0
    %120 = vmatpush1.msra.mxu0 %v105
    %121 = vmatprep.subr.mxu0 0.0
    %122 = vmatpush1.msra.mxu0 0.0
    %123 = vmatprep.subr.mxu0 0.0
    %124 = vmatpush1.msra.mxu0 0.0
    %125 = vmatprep.subr.mxu0 0.0
    %126 = vmatpush1.msra.mxu0 0.0
    %127 = vmatprep.subr.mxu0 0.0
    %128 = vmatpush1.msra.mxu0 0.0
    %129 = vmatprep.subr.mxu0 0.0
    %130 = vmatpush1.msra.mxu0 0.0
    %131 = vmatprep.subr.mxu0 0.0
    %132 = vmatpush1.msra.mxu0 0.0
    %133 = vmatprep.subr.mxu0 0.0
    %134 = vmatpush1.msra.mxu0 0.0
    %135 = vmatprep.subr.mxu0 0.0
    %136 = vmatpush1.msra.mxu0 0.0
    %137 = vmatprep.subr.mxu0 0.0
    %138 = vmatpush1.msra.mxu0 0.0
    %139 = vmatprep.subr.mxu0 0.0
    %140 = vmatpush1.msra.mxu0 0.0
    %141 = vmatprep.subr.mxu0 0.0
    %142 = vmatpush1.msra.mxu0 0.0
    %143 = vmatprep.subr.mxu0 0.0
    %144 = vmatpush1.msra.mxu0 0.0
    %145 = vmatprep.subr.mxu0 0.0
    %146 = vmatpush1.msra.mxu0 0.0
    %147 = vmatprep.subr.mxu0 0.0
    %148 = vmatpush1.msra.mxu0 0.0
    %149 = vmatprep.subr.mxu0 0.0
    %150 = vmatpush1.msra.mxu0 0.0
    %151 = vmatprep.subr.mxu0 0.0
    %152 = vmatpush1.msra.mxu0 0.0
    %153 = vmatprep.subr.mxu0 0.0
    %154 = vmatpush1.msra.mxu0 0.0
    %155 = vmatprep.subr.mxu0 0.0
    %156 = vmatpush1.msra.mxu0 0.0
    %157 = vmatprep.subr.mxu0 0.0
    %158 = vmatpush1.msra.mxu0 0.0
    %159 = vmatprep.subr.mxu0 0.0
    %160 = vmatpush1.msra.mxu0 0.0
    %161 = vmatprep.subr.mxu0 0.0
    %162 = vmatpush1.msra.mxu0 0.0
    %163 = vmatprep.subr.mxu0 0.0
    %164 = vmatpush1.msra.mxu0 0.0
    %165 = vmatprep.subr.mxu0 0.0
    %166 = vmatpush1.msra.mxu0 0.0
    %167 = vmatprep.subr.mxu0 0.0
    %168 = vmatpush1.msra.mxu0 0.0
    %169 = vmatprep.subr.mxu0 0.0
    %170 = vmatpush1.msra.mxu0 0.0
    %171 = vmatprep.subr.mxu0 0.0
    %172 = vmatpush1.msra.mxu0 0.0
    %173 = vmatprep.subr.mxu0 0.0
    %174 = vmatpush1.msra.mxu0 0.0
    %175 = vmatprep.subr.mxu0 0.0
    %176 = vmatpush1.msra.mxu0 0.0
    %177 = vmatprep.mubr.f32.mxu0 0.0
    %178 = vmatmul.mubr.f32.gmra.mrb[0].mxu0 %v111
    %v179 = vpop.f32.mrb[0].mxu0
    %v180 = vadd.f32 0.0, %v179
    %v181 = vpop.f32.mrb[0].mxu0
    %182 = vdwg.mxu0
    %v183 = vadd.f32 %v108, %v180
    %v184 = vtanh.pop %v183
    %v185 = vadd.f32 %v184, 1.0
    %v186 = vmul.f32 %v185, 0.5
    %v188 = vlaneseq
    %v189 = vshrl.u32 %v188, 7
    %v190 = vsub.s32 0, %v189
    %v191 = vrot.slane %v107, %v190
    %192 = vrot.lane.b32.xlu0 %v191, 32
    %v193 = vpop.permute.xlu0 %192
    %v195 = vmul.f32 %v186, %v193
    %197 = vrot.lane.b32.xlu0 %v184, 64
    %v198 = vpop.permute.xlu0 %197
    %v200 = vmul.f32 %v186, %v198
    %202 = vrot.lane.b32.xlu0 %v200, 32
    %v203 = vpop.permute.xlu0 %202
    %v205 = vadd.f32 %v195, %v203
    %v206 = vtanh.pop %v205
    %208 = vrot.lane.b32.xlu0 %v206, 64
    %v209 = vpop.permute.xlu0 %208
    %v211 = vmul.f32 %v186, %v209
    %213 = vrot.lane.b32.xlu0 %v211, 32
    %v214 = vpop.permute.xlu0 %213
    %vm216 = vcmask 253952
    %217 = vst.msk [vmem:[#allocation3] sm:$0x1] %vm216, %v214
    %v218 = vld [vmem:[#allocation6 + $0x1] sm:$0x1]
    %v219 = vsel %vm109, %v214, 0
    %221 = vmatprep.subr.mxu0 0.0
    %222 = vmatpush1.msra.mxu0 %v102
    %223 = vmatprep.subr.mxu0 0.0
    %224 = vmatpush1.msra.mxu0 %v103
    %225 = vmatprep.subr.mxu0 0.0
    %226 = vmatpush1.msra.mxu0 %v104
    %227 = vmatprep.subr.mxu0 0.0
    %228 = vmatpush1.msra.mxu0 %v105
    %229 = vmatprep.subr.mxu0 0.0
    %230 = vmatpush1.msra.mxu0 0.0
    %231 = vmatprep.subr.mxu0 0.0
    %232 = vmatpush1.msra.mxu0 0.0
    %233 = vmatprep.subr.mxu0 0.0
    %234 = vmatpush1.msra.mxu0 0.0
    %235 = vmatprep.subr.mxu0 0.0
    %236 = vmatpush1.msra.mxu0 0.0
    %237 = vmatprep.subr.mxu0 0.0
    %238 = vmatpush1.msra.mxu0 0.0
    %239 = vmatprep.subr.mxu0 0.0
    %240 = vmatpush1.msra.mxu0 0.0
    %241 = vmatprep.subr.mxu0 0.0
    %242 = vmatpush1.msra.mxu0 0.0
    %243 = vmatprep.subr.mxu0 0.0
    %244 = vmatpush1.msra.mxu0 0.0
    %245 = vmatprep.subr.mxu0 0.0
    %246 = vmatpush1.msra.mxu0 0.0
    %247 = vmatprep.subr.mxu0 0.0
    %248 = vmatpush1.msra.mxu0 0.0
    %249 = vmatprep.subr.mxu0 0.0
    %250 = vmatpush1.msra.mxu0 0.0
    %251 = vmatprep.subr.mxu0 0.0
    %252 = vmatpush1.msra.mxu0 0.0
    %253 = vmatprep.subr.mxu0 0.0
    %254 = vmatpush1.msra.mxu0 0.0
    %255 = vmatprep.subr.mxu0 0.0
    %256 = vmatpush1.msra.mxu0 0.0
    %257 = vmatprep.subr.mxu0 0.0
    %258 = vmatpush1.msra.mxu0 0.0
    %259 = vmatprep.subr.mxu0 0.0
    %260 = vmatpush1.msra.mxu0 0.0
    %261 = vmatprep.subr.mxu0 0.0
    %262 = vmatpush1.msra.mxu0 0.0
    %263 = vmatprep.subr.mxu0 0.0
    %264 = vmatpush1.msra.mxu0 0.0
    %265 = vmatprep.subr.mxu0 0.0
    %266 = vmatpush1.msra.mxu0 0.0
    %267 = vmatprep.subr.mxu0 0.0
    %268 = vmatpush1.msra.mxu0 0.0
    %269 = vmatprep.subr.mxu0 0.0
    %270 = vmatpush1.msra.mxu0 0.0
    %271 = vmatprep.subr.mxu0 0.0
    %272 = vmatpush1.msra.mxu0 0.0
    %273 = vmatprep.subr.mxu0 0.0
    %274 = vmatpush1.msra.mxu0 0.0
    %275 = vmatprep.subr.mxu0 0.0
    %276 = vmatpush1.msra.mxu0 0.0
    %277 = vmatprep.subr.mxu0 0.0
    %278 = vmatpush1.msra.mxu0 0.0
    %279 = vmatprep.subr.mxu0 0.0
    %280 = vmatpush1.msra.mxu0 0.0
    %281 = vmatprep.subr.mxu0 0.0
    %282 = vmatpush1.msra.mxu0 0.0
    %283 = vmatprep.subr.mxu0 0.0
    %284 = vmatpush1.msra.mxu0 0.0
    %285 = vmatprep.mubr.f32.mxu0 0.0
    %286 = vmatmul.mubr.f32.gmra.mrb[0].mxu0 %v219
    %v287 = vpop.f32.mrb[0].mxu0
    %v288 = vadd.f32 0.0, %v287
    %v289 = vpop.f32.mrb[0].mxu0
    %290 = vdwg.mxu0
    %v291 = vadd.f32 %v218, %v288
    %v292 = vtanh.pop %v291
    %v293 = vadd.f32 %v292, 1.0
    %v294 = vmul.f32 %v293, 0.5
    %v295 = vmul.f32 %v294, %v205
    %297 = vrot.lane.b32.xlu0 %v292, 64
    %v298 = vpop.permute.xlu0 %297
    %v300 = vmul.f32 %v294, %v298
    %302 = vrot.lane.b32.xlu0 %v300, 32
    %v303 = vpop.permute.xlu0 %302
    %v305 = vadd.f32 %v295, %v303
    %v306 = vtanh.pop %v305
    %308 = vrot.lane.b32.xlu0 %v306, 64
    %v309 = vpop.permute.xlu0 %308
    %v311 = vmul.f32 %v294, %v309
    %313 = vrot.lane.b32.xlu0 %v311, 32
    %v314 = vpop.permute.xlu0 %313
    %316 = vst.msk [vmem:[#allocation3 + $0x1] sm:$0x1] %vm216, %v314
    %v317 = vld [vmem:[#allocation6 + $0x2] sm:$0x1]
    %v318 = vsel %vm109, %v314, 0
    %320 = vmatprep.subr.mxu0 0.0
    %321 = vmatpush1.msra.mxu0 %v102
    %322 = vmatprep.subr.mxu0 0.0
    %323 = vmatpush1.msra.mxu0 %v103
    %324 = vmatprep.subr.mxu0 0.0
    %325 = vmatpush1.msra.mxu0 %v104
    %326 = vmatprep.subr.mxu0 0.0
    %327 = vmatpush1.msra.mxu0 %v105
    %328 = vmatprep.subr.mxu0 0.0
    %329 = vmatpush1.msra.mxu0 0.0
    %330 = vmatprep.subr.mxu0 0.0
    %331 = vmatpush1.msra.mxu0 0.0
    %332 = vmatprep.subr.mxu0 0.0
    %333 = vmatpush1.msra.mxu0 0.0
    %334 = vmatprep.subr.mxu0 0.0
    %335 = vmatpush1.msra.mxu0 0.0
    %336 = vmatprep.subr.mxu0 0.0
    %337 = vmatpush1.msra.mxu0 0.0
    %338 = vmatprep.subr.mxu0 0.0
    %339 = vmatpush1.msra.mxu0 0.0
    %340 = vmatprep.subr.mxu0 0.0
    %341 = vmatpush1.msra.mxu0 0.0
    %342 = vmatprep.subr.mxu0 0.0
    %343 = vmatpush1.msra.mxu0 0.0
    %344 = vmatprep.subr.mxu0 0.0
    %345 = vmatpush1.msra.mxu0 0.0
    %346 = vmatprep.subr.mxu0 0.0
    %347 = vmatpush1.msra.mxu0 0.0
    %348 = vmatprep.subr.mxu0 0.0
    %349 = vmatpush1.msra.mxu0 0.0
    %350 = vmatprep.subr.mxu0 0.0
    %351 = vmatpush1.msra.mxu0 0.0
    %352 = vmatprep.subr.mxu0 0.0
    %353 = vmatpush1.msra.mxu0 0.0
    %354 = vmatprep.subr.mxu0 0.0
    %355 = vmatpush1.msra.mxu0 0.0
    %356 = vmatprep.subr.mxu0 0.0
    %357 = vmatpush1.msra.mxu0 0.0
    %358 = vmatprep.subr.mxu0 0.0
    %359 = vmatpush1.msra.mxu0 0.0
    %360 = vmatprep.subr.mxu0 0.0
    %361 = vmatpush1.msra.mxu0 0.0
    %362 = vmatprep.subr.mxu0 0.0
    %363 = vmatpush1.msra.mxu0 0.0
    %364 = vmatprep.subr.mxu0 0.0
    %365 = vmatpush1.msra.mxu0 0.0
    %366 = vmatprep.subr.mxu0 0.0
    %367 = vmatpush1.msra.mxu0 0.0
    %368 = vmatprep.subr.mxu0 0.0
    %369 = vmatpush1.msra.mxu0 0.0
    %370 = vmatprep.subr.mxu0 0.0
    %371 = vmatpush1.msra.mxu0 0.0
    %372 = vmatprep.subr.mxu0 0.0
    %373 = vmatpush1.msra.mxu0 0.0
    %374 = vmatprep.subr.mxu0 0.0
    %375 = vmatpush1.msra.mxu0 0.0
    %376 = vmatprep.subr.mxu0 0.0
    %377 = vmatpush1.msra.mxu0 0.0
    %378 = vmatprep.subr.mxu0 0.0
    %379 = vmatpush1.msra.mxu0 0.0
    %380 = vmatprep.subr.mxu0 0.0
    %381 = vmatpush1.msra.mxu0 0.0
    %382 = vmatprep.subr.mxu0 0.0
    %383 = vmatpush1.msra.mxu0 0.0
    %384 = vmatprep.mubr.f32.mxu0 0.0
    %385 = vmatmul.mubr.f32.gmra.mrb[0].mxu0 %v318
    %v386 = vpop.f32.mrb[0].mxu0
    %v387 = vadd.f32 0.0, %v386
    %v388 = vpop.f32.mrb[0].mxu0
    %389 = vdwg.mxu0
    %v390 = vadd.f32 %v317, %v387
    %v391 = vtanh.pop %v390
    %v392 = vadd.f32 %v391, 1.0
    %v393 = vmul.f32 %v392, 0.5
    %v394 = vmul.f32 %v393, %v305
    %396 = vrot.lane.b32.xlu0 %v391, 64
    %v397 = vpop.permute.xlu0 %396
    %v399 = vmul.f32 %v393, %v397
    %401 = vrot.lane.b32.xlu0 %v399, 32
    %v402 = vpop.permute.xlu0 %401
    %v404 = vadd.f32 %v394, %v402
    %v405 = vtanh.pop %v404
    %407 = vrot.lane.b32.xlu0 %v405, 64
    %v408 = vpop.permute.xlu0 %407
    %v410 = vmul.f32 %v393, %v408
    %412 = vrot.lane.b32.xlu0 %v410, 32
    %v413 = vpop.permute.xlu0 %412
    %415 = vst.msk [vmem:[#allocation3 + $0x2] sm:$0x1] %vm216, %v413
    %v416 = vld [vmem:[#allocation6 + $0x3] sm:$0x1]
    %v417 = vsel %vm109, %v413, 0
    %419 = vmatprep.subr.mxu0 0.0
    %420 = vmatpush1.msra.mxu0 %v102
    %421 = vmatprep.subr.mxu0 0.0
    %422 = vmatpush1.msra.mxu0 %v103
    %423 = vmatprep.subr.mxu0 0.0
    %424 = vmatpush1.msra.mxu0 %v104
    %425 = vmatprep.subr.mxu0 0.0
    %426 = vmatpush1.msra.mxu0 %v105
    %427 = vmatprep.subr.mxu0 0.0
    %428 = vmatpush1.msra.mxu0 0.0
    %429 = vmatprep.subr.mxu0 0.0
    %430 = vmatpush1.msra.mxu0 0.0
    %431 = vmatprep.subr.mxu0 0.0
    %432 = vmatpush1.msra.mxu0 0.0
    %433 = vmatprep.subr.mxu0 0.0
    %434 = vmatpush1.msra.mxu0 0.0
    %435 = vmatprep.subr.mxu0 0.0
    %436 = vmatpush1.msra.mxu0 0.0
    %437 = vmatprep.subr.mxu0 0.0
    %438 = vmatpush1.msra.mxu0 0.0
    %439 = vmatprep.subr.mxu0 0.0
    %440 = vmatpush1.msra.mxu0 0.0
    %441 = vmatprep.subr.mxu0 0.0
    %442 = vmatpush1.msra.mxu0 0.0
    %443 = vmatprep.subr.mxu0 0.0
    %444 = vmatpush1.msra.mxu0 0.0
    %445 = vmatprep.subr.mxu0 0.0
    %446 = vmatpush1.msra.mxu0 0.0
    %447 = vmatprep.subr.mxu0 0.0
    %448 = vmatpush1.msra.mxu0 0.0
    %449 = vmatprep.subr.mxu0 0.0
    %450 = vmatpush1.msra.mxu0 0.0
    %451 = vmatprep.subr.mxu0 0.0
    %452 = vmatpush1.msra.mxu0 0.0
    %453 = vmatprep.subr.mxu0 0.0
    %454 = vmatpush1.msra.mxu0 0.0
    %455 = vmatprep.subr.mxu0 0.0
    %456 = vmatpush1.msra.mxu0 0.0
    %457 = vmatprep.subr.mxu0 0.0
    %458 = vmatpush1.msra.mxu0 0.0
    %459 = vmatprep.subr.mxu0 0.0
    %460 = vmatpush1.msra.mxu0 0.0
    %461 = vmatprep.subr.mxu0 0.0
    %462 = vmatpush1.msra.mxu0 0.0
    %463 = vmatprep.subr.mxu0 0.0
    %464 = vmatpush1.msra.mxu0 0.0
    %465 = vmatprep.subr.mxu0 0.0
    %466 = vmatpush1.msra.mxu0 0.0
    %467 = vmatprep.subr.mxu0 0.0
    %468 = vmatpush1.msra.mxu0 0.0
    %469 = vmatprep.subr.mxu0 0.0
    %470 = vmatpush1.msra.mxu0 0.0
    %471 = vmatprep.subr.mxu0 0.0
    %472 = vmatpush1.msra.mxu0 0.0
    %473 = vmatprep.subr.mxu0 0.0
    %474 = vmatpush1.msra.mxu0 0.0
    %475 = vmatprep.subr.mxu0 0.0
    %476 = vmatpush1.msra.mxu0 0.0
    %477 = vmatprep.subr.mxu0 0.0
    %478 = vmatpush1.msra.mxu0 0.0
    %479 = vmatprep.subr.mxu0 0.0
    %480 = vmatpush1.msra.mxu0 0.0
    %481 = vmatprep.subr.mxu0 0.0
    %482 = vmatpush1.msra.mxu0 0.0
    %483 = vmatprep.mubr.f32.mxu0 0.0
    %484 = vmatmul.mubr.f32.gmra.mrb[0].mxu0 %v417
    %v485 = vpop.f32.mrb[0].mxu0
    %v486 = vadd.f32 0.0, %v485
    %v487 = vpop.f32.mrb[0].mxu0
    %488 = vdwg.mxu0
    %v489 = vadd.f32 %v416, %v486
    %v490 = vtanh.pop %v489
    %v491 = vadd.f32 %v490, 1.0
    %v492 = vmul.f32 %v491, 0.5
    %v493 = vmul.f32 %v492, %v404
    %495 = vrot.lane.b32.xlu0 %v490, 64
    %v496 = vpop.permute.xlu0 %495
    %v498 = vmul.f32 %v492, %v496
    %500 = vrot.lane.b32.xlu0 %v498, 32
    %v501 = vpop.permute.xlu0 %500
    %v503 = vadd.f32 %v493, %v501
    %v504 = vtanh.pop %v503
    %506 = vrot.lane.b32.xlu0 %v504, 64
    %v507 = vpop.permute.xlu0 %506
    %v509 = vmul.f32 %v492, %v507
    %511 = vrot.lane.b32.xlu0 %v509, 32
    %v512 = vpop.permute.xlu0 %511
    %514 = vst.msk [vmem:[#allocation3 + $0x3] sm:$0x1] %vm216, %v512
    %v515 = vld [vmem:[#allocation6 + $0x4] sm:$0x1]
    %v516 = vsel %vm109, %v512, 0
    %518 = vmatprep.subr.mxu0 0.0
    %519 = vmatpush1.msra.mxu0 %v102
    %520 = vmatprep.subr.mxu0 0.0
    %521 = vmatpush1.msra.mxu0 %v103
    %522 = vmatprep.subr.mxu0 0.0
    %523 = vmatpush1.msra.mxu0 %v104
    %524 = vmatprep.subr.mxu0 0.0
    %525 = vmatpush1.msra.mxu0 %v105
    %526 = vmatprep.subr.mxu0 0.0
    %527 = vmatpush1.msra.mxu0 0.0
    %528 = vmatprep.subr.mxu0 0.0
    %529 = vmatpush1.msra.mxu0 0.0
    %530 = vmatprep.subr.mxu0 0.0
    %531 = vmatpush1.msra.mxu0 0.0
    %532 = vmatprep.subr.mxu0 0.0
    %533 = vmatpush1.msra.mxu0 0.0
    %534 = vmatprep.subr.mxu0 0.0
    %535 = vmatpush1.msra.mxu0 0.0
    %536 = vmatprep.subr.mxu0 0.0
    %537 = vmatpush1.msra.mxu0 0.0
    %538 = vmatprep.subr.mxu0 0.0
    %539 = vmatpush1.msra.mxu0 0.0
    %540 = vmatprep.subr.mxu0 0.0
    %541 = vmatpush1.msra.mxu0 0.0
    %542 = vmatprep.subr.mxu0 0.0
    %543 = vmatpush1.msra.mxu0 0.0
    %544 = vmatprep.subr.mxu0 0.0
    %545 = vmatpush1.msra.mxu0 0.0
    %546 = vmatprep.subr.mxu0 0.0
    %547 = vmatpush1.msra.mxu0 0.0
    %548 = vmatprep.subr.mxu0 0.0
    %549 = vmatpush1.msra.mxu0 0.0
    %550 = vmatprep.subr.mxu0 0.0
    %551 = vmatpush1.msra.mxu0 0.0
    %552 = vmatprep.subr.mxu0 0.0
    %553 = vmatpush1.msra.mxu0 0.0
    %554 = vmatprep.subr.mxu0 0.0
    %555 = vmatpush1.msra.mxu0 0.0
    %556 = vmatprep.subr.mxu0 0.0
    %557 = vmatpush1.msra.mxu0 0.0
    %558 = vmatprep.subr.mxu0 0.0
    %559 = vmatpush1.msra.mxu0 0.0
    %560 = vmatprep.subr.mxu0 0.0
    %561 = vmatpush1.msra.mxu0 0.0
    %562 = vmatprep.subr.mxu0 0.0
    %563 = vmatpush1.msra.mxu0 0.0
    %564 = vmatprep.subr.mxu0 0.0
    %565 = vmatpush1.msra.mxu0 0.0
    %566 = vmatprep.subr.mxu0 0.0
    %567 = vmatpush1.msra.mxu0 0.0
    %568 = vmatprep.subr.mxu0 0.0
    %569 = vmatpush1.msra.mxu0 0.0
    %570 = vmatprep.subr.mxu0 0.0
    %571 = vmatpush1.msra.mxu0 0.0
    %572 = vmatprep.subr.mxu0 0.0
    %573 = vmatpush1.msra.mxu0 0.0
    %574 = vmatprep.subr.mxu0 0.0
    %575 = vmatpush1.msra.mxu0 0.0
    %576 = vmatprep.subr.mxu0 0.0
    %577 = vmatpush1.msra.mxu0 0.0
    %578 = vmatprep.subr.mxu0 0.0
    %579 = vmatpush1.msra.mxu0 0.0
    %580 = vmatprep.subr.mxu0 0.0
    %581 = vmatpush1.msra.mxu0 0.0
    %582 = vmatprep.mubr.f32.mxu0 0.0
    %583 = vmatmul.mubr.f32.gmra.mrb[0].mxu0 %v516
    %v584 = vpop.f32.mrb[0].mxu0
    %v585 = vadd.f32 0.0, %v584
    %v586 = vpop.f32.mrb[0].mxu0
    %587 = vdwg.mxu0
    %v588 = vadd.f32 %v515, %v585
    %v589 = vtanh.pop %v588
    %v590 = vadd.f32 %v589, 1.0
    %v591 = vmul.f32 %v590, 0.5
    %v592 = vmul.f32 %v591, %v503
    %594 = vrot.lane.b32.xlu0 %v589, 64
    %v595 = vpop.permute.xlu0 %594
    %v597 = vmul.f32 %v591, %v595
    %599 = vrot.lane.b32.xlu0 %v597, 32
    %v600 = vpop.permute.xlu0 %599
    %v602 = vadd.f32 %v592, %v600
    %v603 = vtanh.pop %v602
    %605 = vrot.lane.b32.xlu0 %v603, 64
    %v606 = vpop.permute.xlu0 %605
    %v608 = vmul.f32 %v591, %v606
    %610 = vrot.lane.b32.xlu0 %v608, 32
    %v611 = vpop.permute.xlu0 %610
    %613 = vst.msk [vmem:[#allocation3 + $0x4] sm:$0x1] %vm216, %v611
    %v614 = vld [vmem:[#allocation6 + $0x5] sm:$0x1]
    %v615 = vsel %vm109, %v611, 0
    %617 = vmatprep.subr.mxu0 0.0
    %618 = vmatpush1.msra.mxu0 %v102
    %619 = vmatprep.subr.mxu0 0.0
    %620 = vmatpush1.msra.mxu0 %v103
    %621 = vmatprep.subr.mxu0 0.0
    %622 = vmatpush1.msra.mxu0 %v104
    %623 = vmatprep.subr.mxu0 0.0
    %624 = vmatpush1.msra.mxu0 %v105
    %625 = vmatprep.subr.mxu0 0.0
    %626 = vmatpush1.msra.mxu0 0.0
    %627 = vmatprep.subr.mxu0 0.0
    %628 = vmatpush1.msra.mxu0 0.0
    %629 = vmatprep.subr.mxu0 0.0
    %630 = vmatpush1.msra.mxu0 0.0
    %631 = vmatprep.subr.mxu0 0.0
    %632 = vmatpush1.msra.mxu0 0.0
    %633 = vmatprep.subr.mxu0 0.0
    %634 = vmatpush1.msra.mxu0 0.0
    %635 = vmatprep.subr.mxu0 0.0
    %636 = vmatpush1.msra.mxu0 0.0
    %637 = vmatprep.subr.mxu0 0.0
    %638 = vmatpush1.msra.mxu0 0.0
    %639 = vmatprep.subr.mxu0 0.0
    %640 = vmatpush1.msra.mxu0 0.0
    %641 = vmatprep.subr.mxu0 0.0
    %642 = vmatpush1.msra.mxu0 0.0
    %643 = vmatprep.subr.mxu0 0.0
    %644 = vmatpush1.msra.mxu0 0.0
    %645 = vmatprep.subr.mxu0 0.0
    %646 = vmatpush1.msra.mxu0 0.0
    %647 = vmatprep.subr.mxu0 0.0
    %648 = vmatpush1.msra.mxu0 0.0
    %649 = vmatprep.subr.mxu0 0.0
    %650 = vmatpush1.msra.mxu0 0.0
    %651 = vmatprep.subr.mxu0 0.0
    %652 = vmatpush1.msra.mxu0 0.0
    %653 = vmatprep.subr.mxu0 0.0
    %654 = vmatpush1.msra.mxu0 0.0
    %655 = vmatprep.subr.mxu0 0.0
    %656 = vmatpush1.msra.mxu0 0.0
    %657 = vmatprep.subr.mxu0 0.0
    %658 = vmatpush1.msra.mxu0 0.0
    %659 = vmatprep.subr.mxu0 0.0
    %660 = vmatpush1.msra.mxu0 0.0
    %661 = vmatprep.subr.mxu0 0.0
    %662 = vmatpush1.msra.mxu0 0.0
    %663 = vmatprep.subr.mxu0 0.0
    %664 = vmatpush1.msra.mxu0 0.0
    %665 = vmatprep.subr.mxu0 0.0
    %666 = vmatpush1.msra.mxu0 0.0
    %667 = vmatprep.subr.mxu0 0.0
    %668 = vmatpush1.msra.mxu0 0.0
    %669 = vmatprep.subr.mxu0 0.0
    %670 = vmatpush1.msra.mxu0 0.0
    %671 = vmatprep.subr.mxu0 0.0
    %672 = vmatpush1.msra.mxu0 0.0
    %673 = vmatprep.subr.mxu0 0.0
    %674 = vmatpush1.msra.mxu0 0.0
    %675 = vmatprep.subr.mxu0 0.0
    %676 = vmatpush1.msra.mxu0 0.0
    %677 = vmatprep.subr.mxu0 0.0
    %678 = vmatpush1.msra.mxu0 0.0
    %679 = vmatprep.subr.mxu0 0.0
    %680 = vmatpush1.msra.mxu0 0.0
    %681 = vmatprep.mubr.f32.mxu0 0.0
    %682 = vmatmul.mubr.f32.gmra.mrb[0].mxu0 %v615
    %v683 = vpop.f32.mrb[0].mxu0
    %v684 = vadd.f32 0.0, %v683
    %v685 = vpop.f32.mrb[0].mxu0
    %686 = vdwg.mxu0
    %v687 = vadd.f32 %v614, %v684
    %v688 = vtanh.pop %v687
    %v689 = vadd.f32 %v688, 1.0
    %v690 = vmul.f32 %v689, 0.5
    %v691 = vmul.f32 %v690, %v602
    %693 = vrot.lane.b32.xlu0 %v688, 64
    %v694 = vpop.permute.xlu0 %693
    %v696 = vmul.f32 %v690, %v694
    %698 = vrot.lane.b32.xlu0 %v696, 32
    %v699 = vpop.permute.xlu0 %698
    %v701 = vadd.f32 %v691, %v699
    %v702 = vtanh.pop %v701
    %704 = vrot.lane.b32.xlu0 %v702, 64
    %v705 = vpop.permute.xlu0 %704
    %v707 = vmul.f32 %v690, %v705
    %709 = vrot.lane.b32.xlu0 %v707, 32
    %v710 = vpop.permute.xlu0 %709
    %712 = vst.msk [vmem:[#allocation3 + $0x5] sm:$0x1] %vm216, %v710
    %v713 = vld [vmem:[#allocation6 + $0x6] sm:$0x1]
    %v714 = vsel %vm109, %v710, 0
    %716 = vmatprep.subr.mxu0 0.0
    %717 = vmatpush1.msra.mxu0 %v102
    %718 = vmatprep.subr.mxu0 0.0
    %719 = vmatpush1.msra.mxu0 %v103
    %720 = vmatprep.subr.mxu0 0.0
    %721 = vmatpush1.msra.mxu0 %v104
    %722 = vmatprep.subr.mxu0 0.0
    %723 = vmatpush1.msra.mxu0 %v105
    %724 = vmatprep.subr.mxu0 0.0
    %725 = vmatpush1.msra.mxu0 0.0
    %726 = vmatprep.subr.mxu0 0.0
    %727 = vmatpush1.msra.mxu0 0.0
    %728 = vmatprep.subr.mxu0 0.0
    %729 = vmatpush1.msra.mxu0 0.0
    %730 = vmatprep.subr.mxu0 0.0
    %731 = vmatpush1.msra.mxu0 0.0
    %732 = vmatprep.subr.mxu0 0.0
    %733 = vmatpush1.msra.mxu0 0.0
    %734 = vmatprep.subr.mxu0 0.0
    %735 = vmatpush1.msra.mxu0 0.0
    %736 = vmatprep.subr.mxu0 0.0
    %737 = vmatpush1.msra.mxu0 0.0
    %738 = vmatprep.subr.mxu0 0.0
    %739 = vmatpush1.msra.mxu0 0.0
    %740 = vmatprep.subr.mxu0 0.0
    %741 = vmatpush1.msra.mxu0 0.0
    %742 = vmatprep.subr.mxu0 0.0
    %743 = vmatpush1.msra.mxu0 0.0
    %744 = vmatprep.subr.mxu0 0.0
    %745 = vmatpush1.msra.mxu0 0.0
    %746 = vmatprep.subr.mxu0 0.0
    %747 = vmatpush1.msra.mxu0 0.0
    %748 = vmatprep.subr.mxu0 0.0
    %749 = vmatpush1.msra.mxu0 0.0
    %750 = vmatprep.subr.mxu0 0.0
    %751 = vmatpush1.msra.mxu0 0.0
    %752 = vmatprep.subr.mxu0 0.0
    %753 = vmatpush1.msra.mxu0 0.0
    %754 = vmatprep.subr.mxu0 0.0
    %755 = vmatpush1.msra.mxu0 0.0
    %756 = vmatprep.subr.mxu0 0.0
    %757 = vmatpush1.msra.mxu0 0.0
    %758 = vmatprep.subr.mxu0 0.0
    %759 = vmatpush1.msra.mxu0 0.0
    %760 = vmatprep.subr.mxu0 0.0
    %761 = vmatpush1.msra.mxu0 0.0
    %762 = vmatprep.subr.mxu0 0.0
    %763 = vmatpush1.msra.mxu0 0.0
    %764 = vmatprep.subr.mxu0 0.0
    %765 = vmatpush1.msra.mxu0 0.0
    %766 = vmatprep.subr.mxu0 0.0
    %767 = vmatpush1.msra.mxu0 0.0
    %768 = vmatprep.subr.mxu0 0.0
    %769 = vmatpush1.msra.mxu0 0.0
    %770 = vmatprep.subr.mxu0 0.0
    %771 = vmatpush1.msra.mxu0 0.0
    %772 = vmatprep.subr.mxu0 0.0
    %773 = vmatpush1.msra.mxu0 0.0
    %774 = vmatprep.subr.mxu0 0.0
    %775 = vmatpush1.msra.mxu0 0.0
    %776 = vmatprep.subr.mxu0 0.0
    %777 = vmatpush1.msra.mxu0 0.0
    %778 = vmatprep.subr.mxu0 0.0
    %779 = vmatpush1.msra.mxu0 0.0
    %780 = vmatprep.mubr.f32.mxu0 0.0
    %781 = vmatmul.mubr.f32.gmra.mrb[0].mxu0 %v714
    %v782 = vpop.f32.mrb[0].mxu0
    %v783 = vadd.f32 0.0, %v782
    %v784 = vpop.f32.mrb[0].mxu0
    %785 = vdwg.mxu0
    %v786 = vadd.f32 %v713, %v783
    %v787 = vtanh.pop %v786
    %v788 = vadd.f32 %v787, 1.0
    %v789 = vmul.f32 %v788, 0.5
    %v790 = vmul.f32 %v789, %v701
    %792 = vrot.lane.b32.xlu0 %v787, 64
    %v793 = vpop.permute.xlu0 %792
    %v795 = vmul.f32 %v789, %v793
    %797 = vrot.lane.b32.xlu0 %v795, 32
    %v798 = vpop.permute.xlu0 %797
    %v800 = vadd.f32 %v790, %v798
    %v801 = vtanh.pop %v800
    %803 = vrot.lane.b32.xlu0 %v801, 64
    %v804 = vpop.permute.xlu0 %803
    %v806 = vmul.f32 %v789, %v804
    %808 = vrot.lane.b32.xlu0 %v806, 32
    %v809 = vpop.permute.xlu0 %808
    %811 = vst.msk [vmem:[#allocation3 + $0x6] sm:$0x1] %vm216, %v809
    %v812 = vld [vmem:[#allocation6 + $0x7] sm:$0x1]
    %v813 = vsel %vm109, %v809, 0
    %815 = vmatprep.subr.mxu0 0.0
    %816 = vmatpush1.msra.mxu0 %v102
    %817 = vmatprep.subr.mxu0 0.0
    %818 = vmatpush1.msra.mxu0 %v103
    %819 = vmatprep.subr.mxu0 0.0
    %820 = vmatpush1.msra.mxu0 %v104
    %821 = vmatprep.subr.mxu0 0.0
    %822 = vmatpush1.msra.mxu0 %v105
    %823 = vmatprep.subr.mxu0 0.0
    %824 = vmatpush1.msra.mxu0 0.0
    %825 = vmatprep.subr.mxu0 0.0
    %826 = vmatpush1.msra.mxu0 0.0
    %827 = vmatprep.subr.mxu0 0.0
    %828 = vmatpush1.msra.mxu0 0.0
    %829 = vmatprep.subr.mxu0 0.0
    %830 = vmatpush1.msra.mxu0 0.0
    %831 = vmatprep.subr.mxu0 0.0
    %832 = vmatpush1.msra.mxu0 0.0
    %833 = vmatprep.subr.mxu0 0.0
    %834 = vmatpush1.msra.mxu0 0.0
    %835 = vmatprep.subr.mxu0 0.0
    %836 = vmatpush1.msra.mxu0 0.0
    %837 = vmatprep.subr.mxu0 0.0
    %838 = vmatpush1.msra.mxu0 0.0
    %839 = vmatprep.subr.mxu0 0.0
    %840 = vmatpush1.msra.mxu0 0.0
    %841 = vmatprep.subr.mxu0 0.0
    %842 = vmatpush1.msra.mxu0 0.0
    %843 = vmatprep.subr.mxu0 0.0
    %844 = vmatpush1.msra.mxu0 0.0
    %845 = vmatprep.subr.mxu0 0.0
    %846 = vmatpush1.msra.mxu0 0.0
    %847 = vmatprep.subr.mxu0 0.0
    %848 = vmatpush1.msra.mxu0 0.0
    %849 = vmatprep.subr.mxu0 0.0
    %850 = vmatpush1.msra.mxu0 0.0
    %851 = vmatprep.subr.mxu0 0.0
    %852 = vmatpush1.msra.mxu0 0.0
    %853 = vmatprep.subr.mxu0 0.0
    %854 = vmatpush1.msra.mxu0 0.0
    %855 = vmatprep.subr.mxu0 0.0
    %856 = vmatpush1.msra.mxu0 0.0
    %857 = vmatprep.subr.mxu0 0.0
    %858 = vmatpush1.msra.mxu0 0.0
    %859 = vmatprep.subr.mxu0 0.0
    %860 = vmatpush1.msra.mxu0 0.0
    %861 = vmatprep.subr.mxu0 0.0
    %862 = vmatpush1.msra.mxu0 0.0
    %863 = vmatprep.subr.mxu0 0.0
    %864 = vmatpush1.msra.mxu0 0.0
    %865 = vmatprep.subr.mxu0 0.0
    %866 = vmatpush1.msra.mxu0 0.0
    %867 = vmatprep.subr.mxu0 0.0
    %868 = vmatpush1.msra.mxu0 0.0
    %869 = vmatprep.subr.mxu0 0.0
    %870 = vmatpush1.msra.mxu0 0.0
    %871 = vmatprep.subr.mxu0 0.0
    %872 = vmatpush1.msra.mxu0 0.0
    %873 = vmatprep.subr.mxu0 0.0
    %874 = vmatpush1.msra.mxu0 0.0
    %875 = vmatprep.subr.mxu0 0.0
    %876 = vmatpush1.msra.mxu0 0.0
    %877 = vmatprep.subr.mxu0 0.0
    %878 = vmatpush1.msra.mxu0 0.0
    %879 = vmatprep.mubr.f32.mxu0 0.0
    %880 = vmatmul.mubr.f32.gmra.mrb[0].mxu0 %v813
    %v881 = vpop.f32.mrb[0].mxu0
    %v882 = vadd.f32 0.0, %v881
    %v883 = vpop.f32.mrb[0].mxu0
    %884 = vdwg.mxu0
    %v885 = vadd.f32 %v812, %v882
    %v886 = vtanh.pop %v885
    %v887 = vadd.f32 %v886, 1.0
    %v888 = vmul.f32 %v887, 0.5
    %v889 = vmul.f32 %v888, %v800
    %891 = vrot.lane.b32.xlu0 %v886, 64
    %v892 = vpop.permute.xlu0 %891
    %v894 = vmul.f32 %v888, %v892
    %896 = vrot.lane.b32.xlu0 %v894, 32
    %v897 = vpop.permute.xlu0 %896
    %v899 = vadd.f32 %v889, %v897
    %v900 = vtanh.pop %v899
    %902 = vrot.lane.b32.xlu0 %v900, 64
    %v903 = vpop.permute.xlu0 %902
    %v905 = vmul.f32 %v888, %v903
    %907 = vrot.lane.b32.xlu0 %v905, 32
    %v908 = vpop.permute.xlu0 %907
    %910 = vst.msk [vmem:[#allocation3 + $0x7] sm:$0x1] %vm216, %v908
    %911 = vst.msk [vmem:[#allocation4] sm:$0x1] %vm216, %v908
    %913 = vrot.lane.b32.xlu0 %v899, 96
    %v914 = vpop.permute.xlu0 %913
    %916 = vst.msk [vmem:[#allocation5] sm:$0x1] %vm216, %v914
    %v917 = vld [vmem:[#allocation3] sm:$0xff]
    %v918 = vld [vmem:[#allocation11] sm:$0xff]
    %v919 = vld [vmem:[#allocation11 + $0x8] sm:$0xff]
    %v920 = vld [vmem:[#allocation11 + $0x10] sm:$0xff]
    %v921 = vld [vmem:[#allocation11 + $0x18] sm:$0xff]
    %v922 = vld [vmem:[%s4] sm:$0x1]
    %v924 = vlaneseq
    %v925 = vshrl.u32 %v924, 7
    %v926 = vsub.s32 0, %v925
    %v927 = vrot.slane %v922, %v926
    %v930 = vsel %vm109, %v917, 0
    %932 = vmatprep.subr.mxu0 0.0
    %933 = vmatpush1.msra.mxu0 %v918
    %934 = vmatprep.subr.mxu0 0.0
    %935 = vmatpush1.msra.mxu0 %v919
    %936 = vmatprep.subr.mxu0 0.0
    %937 = vmatpush1.msra.mxu0 %v920
    %938 = vmatprep.subr.mxu0 0.0
    %939 = vmatpush1.msra.mxu0 %v921
    %940 = vmatprep.subr.mxu0 0.0
    %941 = vmatpush1.msra.mxu0 0.0
    %942 = vmatprep.subr.mxu0 0.0
    %943 = vmatpush1.msra.mxu0 0.0
    %944 = vmatprep.subr.mxu0 0.0
    %945 = vmatpush1.msra.mxu0 0.0
    %946 = vmatprep.subr.mxu0 0.0
    %947 = vmatpush1.msra.mxu0 0.0
    %948 = vmatprep.subr.mxu0 0.0
    %949 = vmatpush1.msra.mxu0 0.0
    %950 = vmatprep.subr.mxu0 0.0
    %951 = vmatpush1.msra.mxu0 0.0
    %952 = vmatprep.subr.mxu0 0.0
    %953 = vmatpush1.msra.mxu0 0.0
    %954 = vmatprep.subr.mxu0 0.0
    %955 = vmatpush1.msra.mxu0 0.0
    %956 = vmatprep.subr.mxu0 0.0
    %957 = vmatpush1.msra.mxu0 0.0
    %958 = vmatprep.subr.mxu0 0.0
    %959 = vmatpush1.msra.mxu0 0.0
    %960 = vmatprep.subr.mxu0 0.0
    %961 = vmatpush1.msra.mxu0 0.0
    %962 = vmatprep.subr.mxu0 0.0
    %963 = vmatpush1.msra.mxu0 0.0
    %964 = vmatprep.subr.mxu0 0.0
    %965 = vmatpush1.msra.mxu0 0.0
    %966 = vmatprep.subr.mxu0 0.0
    %967 = vmatpush1.msra.mxu0 0.0
    %968 = vmatprep.subr.mxu0 0.0
    %969 = vmatpush1.msra.mxu0 0.0
    %970 = vmatprep.subr.mxu0 0.0
    %971 = vmatpush1.msra.mxu0 0.0
    %972 = vmatprep.subr.mxu0 0.0
    %973 = vmatpush1.msra.mxu0 0.0
    %974 = vmatprep.subr.mxu0 0.0
    %975 = vmatpush1.msra.mxu0 0.0
    %976 = vmatprep.subr.mxu0 0.0
    %977 = vmatpush1.msra.mxu0 0.0
    %978 = vmatprep.subr.mxu0 0.0
    %979 = vmatpush1.msra.mxu0 0.0
    %980 = vmatprep.subr.mxu0 0.0
    %981 = vmatpush1.msra.mxu0 0.0
    %982 = vmatprep.subr.mxu0 0.0
    %983 = vmatpush1.msra.mxu0 0.0
    %984 = vmatprep.subr.mxu0 0.0
    %985 = vmatpush1.msra.mxu0 0.0
    %986 = vmatprep.subr.mxu0 0.0
    %987 = vmatpush1.msra.mxu0 0.0
    %988 = vmatprep.subr.mxu0 0.0
    %989 = vmatpush1.msra.mxu0 0.0
    %990 = vmatprep.subr.mxu0 0.0
    %991 = vmatpush1.msra.mxu0 0.0
    %992 = vmatprep.subr.mxu0 0.0
    %993 = vmatpush1.msra.mxu0 0.0
    %994 = vmatprep.subr.mxu0 0.0
    %995 = vmatpush1.msra.mxu0 0.0
    %996 = vmatprep.mubr.f32.mxu0 0.0
    %997 = vmatmul.mubr.f32.gmra.mrb[0].mxu0 %v930
    %v998 = vpop.f32.mrb[0].mxu0
    %v999 = vadd.f32 %v927, %v998
    %v1000 = vpop.f32.mrb[0].mxu0
    %1001 = vdwg.mxu0
    %1002 = vst [vmem:[#allocation2] sm:$0xff] %v999
    %v1003 = vld [vmem:[#allocation12] sm:$0xff]
    %v1004 = vld [vmem:[#allocation12 + $0x8] sm:$0xff]
    %v1005 = vld [vmem:[#allocation12 + $0x10] sm:$0xff]
    %v1006 = vld [vmem:[#allocation12 + $0x18] sm:$0xff]
    %s1007 = scalar_lea.vmem [#allocation4], 1
    %v1008 = vld [vmem:[%s1007] sm:$0x1]
    %s1009 = scalar_lea.vmem [#allocation5], 1
    %v1010 = vld [vmem:[%s1009] sm:$0x1]
    %v1011 = vld [vmem:[#allocation2] sm:$0x1]
    %v1013 = vsel %vm109, %v1008, 0
    %1015 = vmatprep.subr.mxu0 0.0
    %1016 = vmatpush1.msra.mxu0 %v1003
    %1017 = vmatprep.subr.mxu0 0.0
    %1018 = vmatpush1.msra.mxu0 %v1004
    %1019 = vmatprep.subr.mxu0 0.0
    %1020 = vmatpush1.msra.mxu0 %v1005
    %1021 = vmatprep.subr.mxu0 0.0
    %1022 = vmatpush1.msra.mxu0 %v1006
    %1023 = vmatprep.subr.mxu0 0.0
    %1024 = vmatpush1.msra.mxu0 0.0
    %1025 = vmatprep.subr.mxu0 0.0
    %1026 = vmatpush1.msra.mxu0 0.0
    %1027 = vmatprep.subr.mxu0 0.0
    %1028 = vmatpush1.msra.mxu0 0.0
    %1029 = vmatprep.subr.mxu0 0.0
    %1030 = vmatpush1.msra.mxu0 0.0
    %1031 = vmatprep.subr.mxu0 0.0
    %1032 = vmatpush1.msra.mxu0 0.0
    %1033 = vmatprep.subr.mxu0 0.0
    %1034 = vmatpush1.msra.mxu0 0.0
    %1035 = vmatprep.subr.mxu0 0.0
    %1036 = vmatpush1.msra.mxu0 0.0
    %1037 = vmatprep.subr.mxu0 0.0
    %1038 = vmatpush1.msra.mxu0 0.0
    %1039 = vmatprep.subr.mxu0 0.0
    %1040 = vmatpush1.msra.mxu0 0.0
    %1041 = vmatprep.subr.mxu0 0.0
    %1042 = vmatpush1.msra.mxu0 0.0
    %1043 = vmatprep.subr.mxu0 0.0
    %1044 = vmatpush1.msra.mxu0 0.0
    %1045 = vmatprep.subr.mxu0 0.0
    %1046 = vmatpush1.msra.mxu0 0.0
    %1047 = vmatprep.subr.mxu0 0.0
    %1048 = vmatpush1.msra.mxu0 0.0
    %1049 = vmatprep.subr.mxu0 0.0
    %1050 = vmatpush1.msra.mxu0 0.0
    %1051 = vmatprep.subr.mxu0 0.0
    %1052 = vmatpush1.msra.mxu0 0.0
    %1053 = vmatprep.subr.mxu0 0.0
    %1054 = vmatpush1.msra.mxu0 0.0
    %1055 = vmatprep.subr.mxu0 0.0
    %1056 = vmatpush1.msra.mxu0 0.0
    %1057 = vmatprep.subr.mxu0 0.0
    %1058 = vmatpush1.msra.mxu0 0.0
    %1059 = vmatprep.subr.mxu0 0.0
    %1060 = vmatpush1.msra.mxu0 0.0
    %1061 = vmatprep.subr.mxu0 0.0
    %1062 = vmatpush1.msra.mxu0 0.0
    %1063 = vmatprep.subr.mxu0 0.0
    %1064 = vmatpush1.msra.mxu0 0.0
    %1065 = vmatprep.subr.mxu0 0.0
    %1066 = vmatpush1.msra.mxu0 0.0
    %1067 = vmatprep.subr.mxu0 0.0
    %1068 = vmatpush1.msra.mxu0 0.0
    %1069 = vmatprep.subr.mxu0 0.0
    %1070 = vmatpush1.msra.mxu0 0.0
    %1071 = vmatprep.subr.mxu0 0.0
    %1072 = vmatpush1.msra.mxu0 0.0
    %1073 = vmatprep.subr.mxu0 0.0
    %1074 = vmatpush1.msra.mxu0 0.0
    %1075 = vmatprep.subr.mxu0 0.0
    %1076 = vmatpush1.msra.mxu0 0.0
    %1077 = vmatprep.subr.mxu0 0.0
    %1078 = vmatpush1.msra.mxu0 0.0
    %1079 = vmatprep.mubr.f32.mxu0 0.0
    %1080 = vmatmul.mubr.f32.gmra.mrb[0].mxu0 %v1013
    %v1081 = vpop.f32.mrb[0].mxu0
    %v1082 = vadd.f32 0.0, %v1081
    %v1083 = vpop.f32.mrb[0].mxu0
    %1084 = vdwg.mxu0
    %v1085 = vadd.f32 %v1011, %v1082
    %v1086 = vtanh.pop %v1085
    %v1087 = vadd.f32 %v1086, 1.0
    %v1088 = vmul.f32 %v1087, 0.5
    %v1090 = vlaneseq
    %v1091 = vshrl.u32 %v1090, 7
    %v1092 = vsub.s32 0, %v1091
    %v1093 = vrot.slane %v1010, %v1092
    %1094 = vrot.lane.b32.xlu0 %v1093, 32
    %v1095 = vpop.permute.xlu0 %1094
    %v1097 = vmul.f32 %v1088, %v1095
    %1099 = vrot.lane.b32.xlu0 %v1086, 64
    %v1100 = vpop.permute.xlu0 %1099
    %v1102 = vmul.f32 %v1088, %v1100
    %1104 = vrot.lane.b32.xlu0 %v1102, 32
    %v1105 = vpop.permute.xlu0 %1104
    %v1107 = vadd.f32 %v1097, %v1105
    %v1108 = vtanh.pop %v1107
    %1110 = vrot.lane.b32.xlu0 %v1108, 64
    %v1111 = vpop.permute.xlu0 %1110
    %v1113 = vmul.f32 %v1088, %v1111
    %1115 = vrot.lane.b32.xlu0 %v1113, 32
    %v1116 = vpop.permute.xlu0 %1115
    %1118 = vst.msk [vmem:[#allocation3] sm:$0x1] %vm216, %v1116
    %v1119 = vld [vmem:[#allocation2 + $0x1] sm:$0x1]
    %v1120 = vsel %vm109, %v1116, 0
    %1122 = vmatprep.subr.mxu0 0.0
    %1123 = vmatpush1.msra.mxu0 %v1003
    %1124 = vmatprep.subr.mxu0 0.0
    %1125 = vmatpush1.msra.mxu0 %v1004
    %1126 = vmatprep.subr.mxu0 0.0
    %1127 = vmatpush1.msra.mxu0 %v1005
    %1128 = vmatprep.subr.mxu0 0.0
    %1129 = vmatpush1.msra.mxu0 %v1006
    %1130 = vmatprep.subr.mxu0 0.0
    %1131 = vmatpush1.msra.mxu0 0.0
    %1132 = vmatprep.subr.mxu0 0.0
    %1133 = vmatpush1.msra.mxu0 0.0
    %1134 = vmatprep.subr.mxu0 0.0
    %1135 = vmatpush1.msra.mxu0 0.0
    %1136 = vmatprep.subr.mxu0 0.0
    %1137 = vmatpush1.msra.mxu0 0.0
    %1138 = vmatprep.subr.mxu0 0.0
    %1139 = vmatpush1.msra.mxu0 0.0
    %1140 = vmatprep.subr.mxu0 0.0
    %1141 = vmatpush1.msra.mxu0 0.0
    %1142 = vmatprep.subr.mxu0 0.0
    %1143 = vmatpush1.msra.mxu0 0.0
    %1144 = vmatprep.subr.mxu0 0.0
    %1145 = vmatpush1.msra.mxu0 0.0
    %1146 = vmatprep.subr.mxu0 0.0
    %1147 = vmatpush1.msra.mxu0 0.0
    %1148 = vmatprep.subr.mxu0 0.0
    %1149 = vmatpush1.msra.mxu0 0.0
    %1150 = vmatprep.subr.mxu0 0.0
    %1151 = vmatpush1.msra.mxu0 0.0
    %1152 = vmatprep.subr.mxu0 0.0
    %1153 = vmatpush1.msra.mxu0 0.0
    %1154 = vmatprep.subr.mxu0 0.0
    %1155 = vmatpush1.msra.mxu0 0.0
    %1156 = vmatprep.subr.mxu0 0.0
    %1157 = vmatpush1.msra.mxu0 0.0
    %1158 = vmatprep.subr.mxu0 0.0
    %1159 = vmatpush1.msra.mxu0 0.0
    %1160 = vmatprep.subr.mxu0 0.0
    %1161 = vmatpush1.msra.mxu0 0.0
    %1162 = vmatprep.subr.mxu0 0.0
    %1163 = vmatpush1.msra.mxu0 0.0
    %1164 = vmatprep.subr.mxu0 0.0
    %1165 = vmatpush1.msra.mxu0 0.0
    %1166 = vmatprep.subr.mxu0 0.0
    %1167 = vmatpush1.msra.mxu0 0.0
    %1168 = vmatprep.subr.mxu0 0.0
    %1169 = vmatpush1.msra.mxu0 0.0
    %1170 = vmatprep.subr.mxu0 0.0
    %1171 = vmatpush1.msra.mxu0 0.0
    %1172 = vmatprep.subr.mxu0 0.0
    %1173 = vmatpush1.msra.mxu0 0.0
    %1174 = vmatprep.subr.mxu0 0.0
    %1175 = vmatpush1.msra.mxu0 0.0
    %1176 = vmatprep.subr.mxu0 0.0
    %1177 = vmatpush1.msra.mxu0 0.0
    %1178 = vmatprep.subr.mxu0 0.0
    %1179 = vmatpush1.msra.mxu0 0.0
    %1180 = vmatprep.subr.mxu0 0.0
    %1181 = vmatpush1.msra.mxu0 0.0
    %1182 = vmatprep.subr.mxu0 0.0
    %1183 = vmatpush1.msra.mxu0 0.0
    %1184 = vmatprep.subr.mxu0 0.0
    %1185 = vmatpush1.msra.mxu0 0.0
    %1186 = vmatprep.mubr.f32.mxu0 0.0
    %1187 = vmatmul.mubr.f32.gmra.mrb[0].mxu0 %v1120
    %v1188 = vpop.f32.mrb[0].mxu0
    %v1189 = vadd.f32 0.0, %v1188
    %v1190 = vpop.f32.mrb[0].mxu0
    %1191 = vdwg.mxu0
    %v1192 = vadd.f32 %v1119, %v1189
    %v1193 = vtanh.pop %v1192
    %v1194 = vadd.f32 %v1193, 1.0
    %v1195 = vmul.f32 %v1194, 0.5
    %v1196 = vmul.f32 %v1195, %v1107
    %1198 = vrot.lane.b32.xlu0 %v1193, 64
    %v1199 = vpop.permute.xlu0 %1198
    %v1201 = vmul.f32 %v1195, %v1199
    %1203 = vrot.lane.b32.xlu0 %v1201, 32
    %v1204 = vpop.permute.xlu0 %1203
    %v1206 = vadd.f32 %v1196, %v1204
    %v1207 = vtanh.pop %v1206
    %1209 = vrot.lane.b32.xlu0 %v1207, 64
    %v1210 = vpop.permute.xlu0 %1209
    %v1212 = vmul.f32 %v1195, %v1210
    %1214 = vrot.lane.b32.xlu0 %v1212, 32
    %v1215 = vpop.permute.xlu0 %1214
    %1217 = vst.msk [vmem:[#allocation3 + $0x1] sm:$0x1] %vm216, %v1215
    %v1218 = vld [vmem:[#allocation2 + $0x2] sm:$0x1]
    %v1219 = vsel %vm109, %v1215, 0
    %1221 = vmatprep.subr.mxu0 0.0
    %1222 = vmatpush1.msra.mxu0 %v1003
    %1223 = vmatprep.subr.mxu0 0.0
    %1224 = vmatpush1.msra.mxu0 %v1004
    %1225 = vmatprep.subr.mxu0 0.0
    %1226 = vmatpush1.msra.mxu0 %v1005
    %1227 = vmatprep.subr.mxu0 0.0
    %1228 = vmatpush1.msra.mxu0 %v1006
    %1229 = vmatprep.subr.mxu0 0.0
    %1230 = vmatpush1.msra.mxu0 0.0
    %1231 = vmatprep.subr.mxu0 0.0
    %1232 = vmatpush1.msra.mxu0 0.0
    %1233 = vmatprep.subr.mxu0 0.0
    %1234 = vmatpush1.msra.mxu0 0.0
    %1235 = vmatprep.subr.mxu0 0.0
    %1236 = vmatpush1.msra.mxu0 0.0
    %1237 = vmatprep.subr.mxu0 0.0
    %1238 = vmatpush1.msra.mxu0 0.0
    %1239 = vmatprep.subr.mxu0 0.0
    %1240 = vmatpush1.msra.mxu0 0.0
    %1241 = vmatprep.subr.mxu0 0.0
    %1242 = vmatpush1.msra.mxu0 0.0
    %1243 = vmatprep.subr.mxu0 0.0
    %1244 = vmatpush1.msra.mxu0 0.0
    %1245 = vmatprep.subr.mxu0 0.0
    %1246 = vmatpush1.msra.mxu0 0.0
    %1247 = vmatprep.subr.mxu0 0.0
    %1248 = vmatpush1.msra.mxu0 0.0
    %1249 = vmatprep.subr.mxu0 0.0
    %1250 = vmatpush1.msra.mxu0 0.0
    %1251 = vmatprep.subr.mxu0 0.0
    %1252 = vmatpush1.msra.mxu0 0.0
    %1253 = vmatprep.subr.mxu0 0.0
    %1254 = vmatpush1.msra.mxu0 0.0
    %1255 = vmatprep.subr.mxu0 0.0
    %1256 = vmatpush1.msra.mxu0 0.0
    %1257 = vmatprep.subr.mxu0 0.0
    %1258 = vmatpush1.msra.mxu0 0.0
    %1259 = vmatprep.subr.mxu0 0.0
    %1260 = vmatpush1.msra.mxu0 0.0
    %1261 = vmatprep.subr.mxu0 0.0
    %1262 = vmatpush1.msra.mxu0 0.0
    %1263 = vmatprep.subr.mxu0 0.0
    %1264 = vmatpush1.msra.mxu0 0.0
    %1265 = vmatprep.subr.mxu0 0.0
    %1266 = vmatpush1.msra.mxu0 0.0
    %1267 = vmatprep.subr.mxu0 0.0
    %1268 = vmatpush1.msra.mxu0 0.0
    %1269 = vmatprep.subr.mxu0 0.0
    %1270 = vmatpush1.msra.mxu0 0.0
    %1271 = vmatprep.subr.mxu0 0.0
    %1272 = vmatpush1.msra.mxu0 0.0
    %1273 = vmatprep.subr.mxu0 0.0
    %1274 = vmatpush1.msra.mxu0 0.0
    %1275 = vmatprep.subr.mxu0 0.0
    %1276 = vmatpush1.msra.mxu0 0.0
    %1277 = vmatprep.subr.mxu0 0.0
    %1278 = vmatpush1.msra.mxu0 0.0
    %1279 = vmatprep.subr.mxu0 0.0
    %1280 = vmatpush1.msra.mxu0 0.0
    %1281 = vmatprep.subr.mxu0 0.0
    %1282 = vmatpush1.msra.mxu0 0.0
    %1283 = vmatprep.subr.mxu0 0.0
    %1284 = vmatpush1.msra.mxu0 0.0
    %1285 = vmatprep.mubr.f32.mxu0 0.0
    %1286 = vmatmul.mubr.f32.gmra.mrb[0].mxu0 %v1219
    %v1287 = vpop.f32.mrb[0].mxu0
    %v1288 = vadd.f32 0.0, %v1287
    %v1289 = vpop.f32.mrb[0].mxu0
    %1290 = vdwg.mxu0
    %v1291 = vadd.f32 %v1218, %v1288
    %v1292 = vtanh.pop %v1291
    %v1293 = vadd.f32 %v1292, 1.0
    %v1294 = vmul.f32 %v1293, 0.5
    %v1295 = vmul.f32 %v1294, %v1206
    %1297 = vrot.lane.b32.xlu0 %v1292, 64
    %v1298 = vpop.permute.xlu0 %1297
    %v1300 = vmul.f32 %v1294, %v1298
    %1302 = vrot.lane.b32.xlu0 %v1300, 32
    %v1303 = vpop.permute.xlu0 %1302
    %v1305 = vadd.f32 %v1295, %v1303
    %v1306 = vtanh.pop %v1305
    %1308 = vrot.lane.b32.xlu0 %v1306, 64
    %v1309 = vpop.permute.xlu0 %1308
    %v1311 = vmul.f32 %v1294, %v1309
    %1313 = vrot.lane.b32.xlu0 %v1311, 32
    %v1314 = vpop.permute.xlu0 %1313
    %1316 = vst.msk [vmem:[#allocation3 + $0x2] sm:$0x1] %vm216, %v1314
    %v1317 = vld [vmem:[#allocation2 + $0x3] sm:$0x1]
    %v1318 = vsel %vm109, %v1314, 0
    %1320 = vmatprep.subr.mxu0 0.0
    %1321 = vmatpush1.msra.mxu0 %v1003
    %1322 = vmatprep.subr.mxu0 0.0
    %1323 = vmatpush1.msra.mxu0 %v1004
    %1324 = vmatprep.subr.mxu0 0.0
    %1325 = vmatpush1.msra.mxu0 %v1005
    %1326 = vmatprep.subr.mxu0 0.0
    %1327 = vmatpush1.msra.mxu0 %v1006
    %1328 = vmatprep.subr.mxu0 0.0
    %1329 = vmatpush1.msra.mxu0 0.0
    %1330 = vmatprep.subr.mxu0 0.0
    %1331 = vmatpush1.msra.mxu0 0.0
    %1332 = vmatprep.subr.mxu0 0.0
    %1333 = vmatpush1.msra.mxu0 0.0
    %1334 = vmatprep.subr.mxu0 0.0
    %1335 = vmatpush1.msra.mxu0 0.0
    %1336 = vmatprep.subr.mxu0 0.0
    %1337 = vmatpush1.msra.mxu0 0.0
    %1338 = vmatprep.subr.mxu0 0.0
    %1339 = vmatpush1.msra.mxu0 0.0
    %1340 = vmatprep.subr.mxu0 0.0
    %1341 = vmatpush1.msra.mxu0 0.0
    %1342 = vmatprep.subr.mxu0 0.0
    %1343 = vmatpush1.msra.mxu0 0.0
    %1344 = vmatprep.subr.mxu0 0.0
    %1345 = vmatpush1.msra.mxu0 0.0
    %1346 = vmatprep.subr.mxu0 0.0
    %1347 = vmatpush1.msra.mxu0 0.0
    %1348 = vmatprep.subr.mxu0 0.0
    %1349 = vmatpush1.msra.mxu0 0.0
    %1350 = vmatprep.subr.mxu0 0.0
    %1351 = vmatpush1.msra.mxu0 0.0
    %1352 = vmatprep.subr.mxu0 0.0
    %1353 = vmatpush1.msra.mxu0 0.0
    %1354 = vmatprep.subr.mxu0 0.0
    %1355 = vmatpush1.msra.mxu0 0.0
    %1356 = vmatprep.subr.mxu0 0.0
    %1357 = vmatpush1.msra.mxu0 0.0
    %1358 = vmatprep.subr.mxu0 0.0
    %1359 = vmatpush1.msra.mxu0 0.0
    %1360 = vmatprep.subr.mxu0 0.0
    %1361 = vmatpush1.msra.mxu0 0.0
    %1362 = vmatprep.subr.mxu0 0.0
    %1363 = vmatpush1.msra.mxu0 0.0
    %1364 = vmatprep.subr.mxu0 0.0
    %1365 = vmatpush1.msra.mxu0 0.0
    %1366 = vmatprep.subr.mxu0 0.0
    %1367 = vmatpush1.msra.mxu0 0.0
    %1368 = vmatprep.subr.mxu0 0.0
    %1369 = vmatpush1.msra.mxu0 0.0
    %1370 = vmatprep.subr.mxu0 0.0
    %1371 = vmatpush1.msra.mxu0 0.0
    %1372 = vmatprep.subr.mxu0 0.0
    %1373 = vmatpush1.msra.mxu0 0.0
    %1374 = vmatprep.subr.mxu0 0.0
    %1375 = vmatpush1.msra.mxu0 0.0
    %1376 = vmatprep.subr.mxu0 0.0
    %1377 = vmatpush1.msra.mxu0 0.0
    %1378 = vmatprep.subr.mxu0 0.0
    %1379 = vmatpush1.msra.mxu0 0.0
    %1380 = vmatprep.subr.mxu0 0.0
    %1381 = vmatpush1.msra.mxu0 0.0
    %1382 = vmatprep.subr.mxu0 0.0
    %1383 = vmatpush1.msra.mxu0 0.0
    %1384 = vmatprep.mubr.f32.mxu0 0.0
    %1385 = vmatmul.mubr.f32.gmra.mrb[0].mxu0 %v1318
    %v1386 = vpop.f32.mrb[0].mxu0
    %v1387 = vadd.f32 0.0, %v1386
    %v1388 = vpop.f32.mrb[0].mxu0
    %1389 = vdwg.mxu0
    %v1390 = vadd.f32 %v1317, %v1387
    %v1391 = vtanh.pop %v1390
    %v1392 = vadd.f32 %v1391, 1.0
    %v1393 = vmul.f32 %v1392, 0.5
    %v1394 = vmul.f32 %v1393, %v1305
    %1396 = vrot.lane.b32.xlu0 %v1391, 64
    %v1397 = vpop.permute.xlu0 %1396
    %v1399 = vmul.f32 %v1393, %v1397
    %1401 = vrot.lane.b32.xlu0 %v1399, 32
    %v1402 = vpop.permute.xlu0 %1401
    %v1404 = vadd.f32 %v1394, %v1402
    %v1405 = vtanh.pop %v1404
    %1407 = vrot.lane.b32.xlu0 %v1405, 64
    %v1408 = vpop.permute.xlu0 %1407
    %v1410 = vmul.f32 %v1393, %v1408
    %1412 = vrot.lane.b32.xlu0 %v1410, 32
    %v1413 = vpop.permute.xlu0 %1412
    %1415 = vst.msk [vmem:[#allocation3 + $0x3] sm:$0x1] %vm216, %v1413
    %v1416 = vld [vmem:[#allocation2 + $0x4] sm:$0x1]
    %v1417 = vsel %vm109, %v1413, 0
    %1419 = vmatprep.subr.mxu0 0.0
    %1420 = vmatpush1.msra.mxu0 %v1003
    %1421 = vmatprep.subr.mxu0 0.0
    %1422 = vmatpush1.msra.mxu0 %v1004
    %1423 = vmatprep.subr.mxu0 0.0
    %1424 = vmatpush1.msra.mxu0 %v1005
    %1425 = vmatprep.subr.mxu0 0.0
    %1426 = vmatpush1.msra.mxu0 %v1006
    %1427 = vmatprep.subr.mxu0 0.0
    %1428 = vmatpush1.msra.mxu0 0.0
    %1429 = vmatprep.subr.mxu0 0.0
    %1430 = vmatpush1.msra.mxu0 0.0
    %1431 = vmatprep.subr.mxu0 0.0
    %1432 = vmatpush1.msra.mxu0 0.0
    %1433 = vmatprep.subr.mxu0 0.0
    %1434 = vmatpush1.msra.mxu0 0.0
    %1435 = vmatprep.subr.mxu0 0.0
    %1436 = vmatpush1.msra.mxu0 0.0
    %1437 = vmatprep.subr.mxu0 0.0
    %1438 = vmatpush1.msra.mxu0 0.0
    %1439 = vmatprep.subr.mxu0 0.0
    %1440 = vmatpush1.msra.mxu0 0.0
    %1441 = vmatprep.subr.mxu0 0.0
    %1442 = vmatpush1.msra.mxu0 0.0
    %1443 = vmatprep.subr.mxu0 0.0
    %1444 = vmatpush1.msra.mxu0 0.0
    %1445 = vmatprep.subr.mxu0 0.0
    %1446 = vmatpush1.msra.mxu0 0.0
    %1447 = vmatprep.subr.mxu0 0.0
    %1448 = vmatpush1.msra.mxu0 0.0
    %1449 = vmatprep.subr.mxu0 0.0
    %1450 = vmatpush1.msra.mxu0 0.0
    %1451 = vmatprep.subr.mxu0 0.0
    %1452 = vmatpush1.msra.mxu0 0.0
    %1453 = vmatprep.subr.mxu0 0.0
    %1454 = vmatpush1.msra.mxu0 0.0
    %1455 = vmatprep.subr.mxu0 0.0
    %1456 = vmatpush1.msra.mxu0 0.0
    %1457 = vmatprep.subr.mxu0 0.0
    %1458 = vmatpush1.msra.mxu0 0.0
    %1459 = vmatprep.subr.mxu0 0.0
    %1460 = vmatpush1.msra.mxu0 0.0
    %1461 = vmatprep.subr.mxu0 0.0
    %1462 = vmatpush1.msra.mxu0 0.0
    %1463 = vmatprep.subr.mxu0 0.0
    %1464 = vmatpush1.msra.mxu0 0.0
    %1465 = vmatprep.subr.mxu0 0.0
    %1466 = vmatpush1.msra.mxu0 0.0
    %1467 = vmatprep.subr.mxu0 0.0
    %1468 = vmatpush1.msra.mxu0 0.0
    %1469 = vmatprep.subr.mxu0 0.0
    %1470 = vmatpush1.msra.mxu0 0.0
    %1471 = vmatprep.subr.mxu0 0.0
    %1472 = vmatpush1.msra.mxu0 0.0
    %1473 = vmatprep.subr.mxu0 0.0
    %1474 = vmatpush1.msra.mxu0 0.0
    %1475 = vmatprep.subr.mxu0 0.0
    %1476 = vmatpush1.msra.mxu0 0.0
    %1477 = vmatprep.subr.mxu0 0.0
    %1478 = vmatpush1.msra.mxu0 0.0
    %1479 = vmatprep.subr.mxu0 0.0
    %1480 = vmatpush1.msra.mxu0 0.0
    %1481 = vmatprep.subr.mxu0 0.0
    %1482 = vmatpush1.msra.mxu0 0.0
    %1483 = vmatprep.mubr.f32.mxu0 0.0
    %1484 = vmatmul.mubr.f32.gmra.mrb[0].mxu0 %v1417
    %v1485 = vpop.f32.mrb[0].mxu0
    %v1486 = vadd.f32 0.0, %v1485
    %v1487 = vpop.f32.mrb[0].mxu0
    %1488 = vdwg.mxu0
    %v1489 = vadd.f32 %v1416, %v1486
    %v1490 = vtanh.pop %v1489
    %v1491 = vadd.f32 %v1490, 1.0
    %v1492 = vmul.f32 %v1491, 0.5
    %v1493 = vmul.f32 %v1492, %v1404
    %1495 = vrot.lane.b32.xlu0 %v1490, 64
    %v1496 = vpop.permute.xlu0 %1495
    %v1498 = vmul.f32 %v1492, %v1496
    %1500 = vrot.lane.b32.xlu0 %v1498, 32
    %v1501 = vpop.permute.xlu0 %1500
    %v1503 = vadd.f32 %v1493, %v1501
    %v1504 = vtanh.pop %v1503
    %1506 = vrot.lane.b32.xlu0 %v1504, 64
    %v1507 = vpop.permute.xlu0 %1506
    %v1509 = vmul.f32 %v1492, %v1507
    %1511 = vrot.lane.b32.xlu0 %v1509, 32
    %v1512 = vpop.permute.xlu0 %1511
    %1514 = vst.msk [vmem:[#allocation3 + $0x4] sm:$0x1] %vm216, %v1512
    %v1515 = vld [vmem:[#allocation2 + $0x5] sm:$0x1]
    %v1516 = vsel %vm109, %v1512, 0
    %1518 = vmatprep.subr.mxu0 0.0
    %1519 = vmatpush1.msra.mxu0 %v1003
    %1520 = vmatprep.subr.mxu0 0.0
    %1521 = vmatpush1.msra.mxu0 %v1004
    %1522 = vmatprep.subr.mxu0 0.0
    %1523 = vmatpush1.msra.mxu0 %v1005
    %1524 = vmatprep.subr.mxu0 0.0
    %1525 = vmatpush1.msra.mxu0 %v1006
    %1526 = vmatprep.subr.mxu0 0.0
    %1527 = vmatpush1.msra.mxu0 0.0
    %1528 = vmatprep.subr.mxu0 0.0
    %1529 = vmatpush1.msra.mxu0 0.0
    %1530 = vmatprep.subr.mxu0 0.0
    %1531 = vmatpush1.msra.mxu0 0.0
    %1532 = vmatprep.subr.mxu0 0.0
    %1533 = vmatpush1.msra.mxu0 0.0
    %1534 = vmatprep.subr.mxu0 0.0
    %1535 = vmatpush1.msra.mxu0 0.0
    %1536 = vmatprep.subr.mxu0 0.0
    %1537 = vmatpush1.msra.mxu0 0.0
    %1538 = vmatprep.subr.mxu0 0.0
    %1539 = vmatpush1.msra.mxu0 0.0
    %1540 = vmatprep.subr.mxu0 0.0
    %1541 = vmatpush1.msra.mxu0 0.0
    %1542 = vmatprep.subr.mxu0 0.0
    %1543 = vmatpush1.msra.mxu0 0.0
    %1544 = vmatprep.subr.mxu0 0.0
    %1545 = vmatpush1.msra.mxu0 0.0
    %1546 = vmatprep.subr.mxu0 0.0
    %1547 = vmatpush1.msra.mxu0 0.0
    %1548 = vmatprep.subr.mxu0 0.0
    %1549 = vmatpush1.msra.mxu0 0.0
    %1550 = vmatprep.subr.mxu0 0.0
    %1551 = vmatpush1.msra.mxu0 0.0
    %1552 = vmatprep.subr.mxu0 0.0
    %1553 = vmatpush1.msra.mxu0 0.0
    %1554 = vmatprep.subr.mxu0 0.0
    %1555 = vmatpush1.msra.mxu0 0.0
    %1556 = vmatprep.subr.mxu0 0.0
    %1557 = vmatpush1.msra.mxu0 0.0
    %1558 = vmatprep.subr.mxu0 0.0
    %1559 = vmatpush1.msra.mxu0 0.0
    %1560 = vmatprep.subr.mxu0 0.0
    %1561 = vmatpush1.msra.mxu0 0.0
    %1562 = vmatprep.subr.mxu0 0.0
    %1563 = vmatpush1.msra.mxu0 0.0
    %1564 = vmatprep.subr.mxu0 0.0
    %1565 = vmatpush1.msra.mxu0 0.0
    %1566 = vmatprep.subr.mxu0 0.0
    %1567 = vmatpush1.msra.mxu0 0.0
    %1568 = vmatprep.subr.mxu0 0.0
    %1569 = vmatpush1.msra.mxu0 0.0
    %1570 = vmatprep.subr.mxu0 0.0
    %1571 = vmatpush1.msra.mxu0 0.0
    %1572 = vmatprep.subr.mxu0 0.0
    %1573 = vmatpush1.msra.mxu0 0.0
    %1574 = vmatprep.subr.mxu0 0.0
    %1575 = vmatpush1.msra.mxu0 0.0
    %1576 = vmatprep.subr.mxu0 0.0
    %1577 = vmatpush1.msra.mxu0 0.0
    %1578 = vmatprep.subr.mxu0 0.0
    %1579 = vmatpush1.msra.mxu0 0.0
    %1580 = vmatprep.subr.mxu0 0.0
    %1581 = vmatpush1.msra.mxu0 0.0
    %1582 = vmatprep.mubr.f32.mxu0 0.0
    %1583 = vmatmul.mubr.f32.gmra.mrb[0].mxu0 %v1516
    %v1584 = vpop.f32.mrb[0].mxu0
    %v1585 = vadd.f32 0.0, %v1584
    %v1586 = vpop.f32.mrb[0].mxu0
    %1587 = vdwg.mxu0
    %v1588 = vadd.f32 %v1515, %v1585
    %v1589 = vtanh.pop %v1588
    %v1590 = vadd.f32 %v1589, 1.0
    %v1591 = vmul.f32 %v1590, 0.5
    %v1592 = vmul.f32 %v1591, %v1503
    %1594 = vrot.lane.b32.xlu0 %v1589, 64
    %v1595 = vpop.permute.xlu0 %1594
    %v1597 = vmul.f32 %v1591, %v1595
    %1599 = vrot.lane.b32.xlu0 %v1597, 32
    %v1600 = vpop.permute.xlu0 %1599
    %v1602 = vadd.f32 %v1592, %v1600
    %v1603 = vtanh.pop %v1602
    %1605 = vrot.lane.b32.xlu0 %v1603, 64
    %v1606 = vpop.permute.xlu0 %1605
    %v1608 = vmul.f32 %v1591, %v1606
    %1610 = vrot.lane.b32.xlu0 %v1608, 32
    %v1611 = vpop.permute.xlu0 %1610
    %1613 = vst.msk [vmem:[#allocation3 + $0x5] sm:$0x1] %vm216, %v1611
    %v1614 = vld [vmem:[#allocation2 + $0x6] sm:$0x1]
    %v1615 = vsel %vm109, %v1611, 0
    %1617 = vmatprep.subr.mxu0 0.0
    %1618 = vmatpush1.msra.mxu0 %v1003
    %1619 = vmatprep.subr.mxu0 0.0
    %1620 = vmatpush1.msra.mxu0 %v1004
    %1621 = vmatprep.subr.mxu0 0.0
    %1622 = vmatpush1.msra.mxu0 %v1005
    %1623 = vmatprep.subr.mxu0 0.0
    %1624 = vmatpush1.msra.mxu0 %v1006
    %1625 = vmatprep.subr.mxu0 0.0
    %1626 = vmatpush1.msra.mxu0 0.0
    %1627 = vmatprep.subr.mxu0 0.0
    %1628 = vmatpush1.msra.mxu0 0.0
    %1629 = vmatprep.subr.mxu0 0.0
    %1630 = vmatpush1.msra.mxu0 0.0
    %1631 = vmatprep.subr.mxu0 0.0
    %1632 = vmatpush1.msra.mxu0 0.0
    %1633 = vmatprep.subr.mxu0 0.0
    %1634 = vmatpush1.msra.mxu0 0.0
    %1635 = vmatprep.subr.mxu0 0.0
    %1636 = vmatpush1.msra.mxu0 0.0
    %1637 = vmatprep.subr.mxu0 0.0
    %1638 = vmatpush1.msra.mxu0 0.0
    %1639 = vmatprep.subr.mxu0 0.0
    %1640 = vmatpush1.msra.mxu0 0.0
    %1641 = vmatprep.subr.mxu0 0.0
    %1642 = vmatpush1.msra.mxu0 0.0
    %1643 = vmatprep.subr.mxu0 0.0
    %1644 = vmatpush1.msra.mxu0 0.0
    %1645 = vmatprep.subr.mxu0 0.0
    %1646 = vmatpush1.msra.mxu0 0.0
    %1647 = vmatprep.subr.mxu0 0.0
    %1648 = vmatpush1.msra.mxu0 0.0
    %1649 = vmatprep.subr.mxu0 0.0
    %1650 = vmatpush1.msra.mxu0 0.0
    %1651 = vmatprep.subr.mxu0 0.0
    %1652 = vmatpush1.msra.mxu0 0.0
    %1653 = vmatprep.subr.mxu0 0.0
    %1654 = vmatpush1.msra.mxu0 0.0
    %1655 = vmatprep.subr.mxu0 0.0
    %1656 = vmatpush1.msra.mxu0 0.0
    %1657 = vmatprep.subr.mxu0 0.0
    %1658 = vmatpush1.msra.mxu0 0.0
    %1659 = vmatprep.subr.mxu0 0.0
    %1660 = vmatpush1.msra.mxu0 0.0
    %1661 = vmatprep.subr.mxu0 0.0
    %1662 = vmatpush1.msra.mxu0 0.0
    %1663 = vmatprep.subr.mxu0 0.0
    %1664 = vmatpush1.msra.mxu0 0.0
    %1665 = vmatprep.subr.mxu0 0.0
    %1666 = vmatpush1.msra.mxu0 0.0
    %1667 = vmatprep.subr.mxu0 0.0
    %1668 = vmatpush1.msra.mxu0 0.0
    %1669 = vmatprep.subr.mxu0 0.0
    %1670 = vmatpush1.msra.mxu0 0.0
    %1671 = vmatprep.subr.mxu0 0.0
    %1672 = vmatpush1.msra.mxu0 0.0
    %1673 = vmatprep.subr.mxu0 0.0
    %1674 = vmatpush1.msra.mxu0 0.0
    %1675 = vmatprep.subr.mxu0 0.0
    %1676 = vmatpush1.msra.mxu0 0.0
    %1677 = vmatprep.subr.mxu0 0.0
    %1678 = vmatpush1.msra.mxu0 0.0
    %1679 = vmatprep.subr.mxu0 0.0
    %1680 = vmatpush1.msra.mxu0 0.0
    %1681 = vmatprep.mubr.f32.mxu0 0.0
    %1682 = vmatmul.mubr.f32.gmra.mrb[0].mxu0 %v1615
    %v1683 = vpop.f32.mrb[0].mxu0
    %v1684 = vadd.f32 0.0, %v1683
    %v1685 = vpop.f32.mrb[0].mxu0
    %1686 = vdwg.mxu0
    %v1687 = vadd.f32 %v1614, %v1684
    %v1688 = vtanh.pop %v1687
    %v1689 = vadd.f32 %v1688, 1.0
    %v1690 = vmul.f32 %v1689, 0.5
    %v1691 = vmul.f32 %v1690, %v1602
    %1693 = vrot.lane.b32.xlu0 %v1688, 64
    %v1694 = vpop.permute.xlu0 %1693
    %v1696 = vmul.f32 %v1690, %v1694
    %1698 = vrot.lane.b32.xlu0 %v1696, 32
    %v1699 = vpop.permute.xlu0 %1698
    %v1701 = vadd.f32 %v1691, %v1699
    %v1702 = vtanh.pop %v1701
    %1704 = vrot.lane.b32.xlu0 %v1702, 64
    %v1705 = vpop.permute.xlu0 %1704
    %v1707 = vmul.f32 %v1690, %v1705
    %1709 = vrot.lane.b32.xlu0 %v1707, 32
    %v1710 = vpop.permute.xlu0 %1709
    %1712 = vst.msk [vmem:[#allocation3 + $0x6] sm:$0x1] %vm216, %v1710
    %v1713 = vld [vmem:[#allocation2 + $0x7] sm:$0x1]
    %v1714 = vsel %vm109, %v1710, 0
    %1716 = vmatprep.subr.mxu0 0.0
    %1717 = vmatpush1.msra.mxu0 %v1003
    %1718 = vmatprep.subr.mxu0 0.0
    %1719 = vmatpush1.msra.mxu0 %v1004
    %1720 = vmatprep.subr.mxu0 0.0
    %1721 = vmatpush1.msra.mxu0 %v1005
    %1722 = vmatprep.subr.mxu0 0.0
    %1723 = vmatpush1.msra.mxu0 %v1006
    %1724 = vmatprep.subr.mxu0 0.0
    %1725 = vmatpush1.msra.mxu0 0.0
    %1726 = vmatprep.subr.mxu0 0.0
    %1727 = vmatpush1.msra.mxu0 0.0
    %1728 = vmatprep.subr.mxu0 0.0
    %1729 = vmatpush1.msra.mxu0 0.0
    %1730 = vmatprep.subr.mxu0 0.0
    %1731 = vmatpush1.msra.mxu0 0.0
    %1732 = vmatprep.subr.mxu0 0.0
    %1733 = vmatpush1.msra.mxu0 0.0
    %1734 = vmatprep.subr.mxu0 0.0
    %1735 = vmatpush1.msra.mxu0 0.0
    %1736 = vmatprep.subr.mxu0 0.0
    %1737 = vmatpush1.msra.mxu0 0.0
    %1738 = vmatprep.subr.mxu0 0.0
    %1739 = vmatpush1.msra.mxu0 0.0
    %1740 = vmatprep.subr.mxu0 0.0
    %1741 = vmatpush1.msra.mxu0 0.0
    %1742 = vmatprep.subr.mxu0 0.0
    %1743 = vmatpush1.msra.mxu0 0.0
    %1744 = vmatprep.subr.mxu0 0.0
    %1745 = vmatpush1.msra.mxu0 0.0
    %1746 = vmatprep.subr.mxu0 0.0
    %1747 = vmatpush1.msra.mxu0 0.0
    %1748 = vmatprep.subr.mxu0 0.0
    %1749 = vmatpush1.msra.mxu0 0.0
    %1750 = vmatprep.subr.mxu0 0.0
    %1751 = vmatpush1.msra.mxu0 0.0
    %1752 = vmatprep.subr.mxu0 0.0
    %1753 = vmatpush1.msra.mxu0 0.0
    %1754 = vmatprep.subr.mxu0 0.0
    %1755 = vmatpush1.msra.mxu0 0.0
    %1756 = vmatprep.subr.mxu0 0.0
    %1757 = vmatpush1.msra.mxu0 0.0
    %1758 = vmatprep.subr.mxu0 0.0
    %1759 = vmatpush1.msra.mxu0 0.0
    %1760 = vmatprep.subr.mxu0 0.0
    %1761 = vmatpush1.msra.mxu0 0.0
    %1762 = vmatprep.subr.mxu0 0.0
    %1763 = vmatpush1.msra.mxu0 0.0
    %1764 = vmatprep.subr.mxu0 0.0
    %1765 = vmatpush1.msra.mxu0 0.0
    %1766 = vmatprep.subr.mxu0 0.0
    %1767 = vmatpush1.msra.mxu0 0.0
    %1768 = vmatprep.subr.mxu0 0.0
    %1769 = vmatpush1.msra.mxu0 0.0
    %1770 = vmatprep.subr.mxu0 0.0
    %1771 = vmatpush1.msra.mxu0 0.0
    %1772 = vmatprep.subr.mxu0 0.0
    %1773 = vmatpush1.msra.mxu0 0.0
    %1774 = vmatprep.subr.mxu0 0.0
    %1775 = vmatpush1.msra.mxu0 0.0
    %1776 = vmatprep.subr.mxu0 0.0
    %1777 = vmatpush1.msra.mxu0 0.0
    %1778 = vmatprep.subr.mxu0 0.0
    %1779 = vmatpush1.msra.mxu0 0.0
    %1780 = vmatprep.mubr.f32.mxu0 0.0
    %1781 = vmatmul.mubr.f32.gmra.mrb[0].mxu0 %v1714
    %v1782 = vpop.f32.mrb[0].mxu0
    %v1783 = vadd.f32 0.0, %v1782
    %v1784 = vpop.f32.mrb[0].mxu0
    %1785 = vdwg.mxu0
    %v1786 = vadd.f32 %v1713, %v1783
    %v1787 = vtanh.pop %v1786
    %v1788 = vadd.f32 %v1787, 1.0
    %v1789 = vmul.f32 %v1788, 0.5
    %v1790 = vmul.f32 %v1789, %v1701
    %1792 = vrot.lane.b32.xlu0 %v1787, 64
    %v1793 = vpop.permute.xlu0 %1792
    %v1795 = vmul.f32 %v1789, %v1793
    %1797 = vrot.lane.b32.xlu0 %v1795, 32
    %v1798 = vpop.permute.xlu0 %1797
    %v1800 = vadd.f32 %v1790, %v1798
    %v1801 = vtanh.pop %v1800
    %1803 = vrot.lane.b32.xlu0 %v1801, 64
    %v1804 = vpop.permute.xlu0 %1803
    %v1806 = vmul.f32 %v1789, %v1804
    %1808 = vrot.lane.b32.xlu0 %v1806, 32
    %v1809 = vpop.permute.xlu0 %1808
    %1811 = vst.msk [vmem:[#allocation3 + $0x7] sm:$0x1] %vm216, %v1809
    %1812 = vst.msk [vmem:[%s1007] sm:$0x1] %vm216, %v1809
    %1814 = vrot.lane.b32.xlu0 %v1800, 96
    %v1815 = vpop.permute.xlu0 %1814
    %1817 = vst.msk [vmem:[%s1009] sm:$0x1] %vm216, %v1815
    %v1818 = vld [vmem:[#allocation3] sm:$0xff]
    %v1819 = vld [vmem:[#allocation14] sm:$0xff]
    %v1820 = vld [vmem:[#allocation14 + $0x8] sm:$0xff]
    %v1821 = vld [vmem:[#allocation14 + $0x10] sm:$0xff]
    %v1822 = vld [vmem:[#allocation14 + $0x18] sm:$0xff]
    %v1823 = vld [vmem:[%s6] sm:$0x1]
    %v1825 = vlaneseq
    %v1826 = vshrl.u32 %v1825, 7
    %v1827 = vsub.s32 0, %v1826
    %v1828 = vrot.slane %v1823, %v1827
    %v1831 = vsel %vm109, %v1818, 0
    %1833 = vmatprep.subr.mxu0 0.0
    %1834 = vmatpush1.msra.mxu0 %v1819
    %1835 = vmatprep.subr.mxu0 0.0
    %1836 = vmatpush1.msra.mxu0 %v1820
    %1837 = vmatprep.subr.mxu0 0.0
    %1838 = vmatpush1.msra.mxu0 %v1821
    %1839 = vmatprep.subr.mxu0 0.0
    %1840 = vmatpush1.msra.mxu0 %v1822
    %1841 = vmatprep.subr.mxu0 0.0
    %1842 = vmatpush1.msra.mxu0 0.0
    %1843 = vmatprep.subr.mxu0 0.0
    %1844 = vmatpush1.msra.mxu0 0.0
    %1845 = vmatprep.subr.mxu0 0.0
    %1846 = vmatpush1.msra.mxu0 0.0
    %1847 = vmatprep.subr.mxu0 0.0
    %1848 = vmatpush1.msra.mxu0 0.0
    %1849 = vmatprep.subr.mxu0 0.0
    %1850 = vmatpush1.msra.mxu0 0.0
    %1851 = vmatprep.subr.mxu0 0.0
    %1852 = vmatpush1.msra.mxu0 0.0
    %1853 = vmatprep.subr.mxu0 0.0
    %1854 = vmatpush1.msra.mxu0 0.0
    %1855 = vmatprep.subr.mxu0 0.0
    %1856 = vmatpush1.msra.mxu0 0.0
    %1857 = vmatprep.subr.mxu0 0.0
    %1858 = vmatpush1.msra.mxu0 0.0
    %1859 = vmatprep.subr.mxu0 0.0
    %1860 = vmatpush1.msra.mxu0 0.0
    %1861 = vmatprep.subr.mxu0 0.0
    %1862 = vmatpush1.msra.mxu0 0.0
    %1863 = vmatprep.subr.mxu0 0.0
    %1864 = vmatpush1.msra.mxu0 0.0
    %1865 = vmatprep.subr.mxu0 0.0
    %1866 = vmatpush1.msra.mxu0 0.0
    %1867 = vmatprep.subr.mxu0 0.0
    %1868 = vmatpush1.msra.mxu0 0.0
    %1869 = vmatprep.subr.mxu0 0.0
    %1870 = vmatpush1.msra.mxu0 0.0
    %1871 = vmatprep.subr.mxu0 0.0
    %1872 = vmatpush1.msra.mxu0 0.0
    %1873 = vmatprep.subr.mxu0 0.0
    %1874 = vmatpush1.msra.mxu0 0.0
    %1875 = vmatprep.subr.mxu0 0.0
    %1876 = vmatpush1.msra.mxu0 0.0
    %1877 = vmatprep.subr.mxu0 0.0
    %1878 = vmatpush1.msra.mxu0 0.0
    %1879 = vmatprep.subr.mxu0 0.0
    %1880 = vmatpush1.msra.mxu0 0.0
    %1881 = vmatprep.subr.mxu0 0.0
    %1882 = vmatpush1.msra.mxu0 0.0
    %1883 = vmatprep.subr.mxu0 0.0
    %1884 = vmatpush1.msra.mxu0 0.0
    %1885 = vmatprep.subr.mxu0 0.0
    %1886 = vmatpush1.msra.mxu0 0.0
    %1887 = vmatprep.subr.mxu0 0.0
    %1888 = vmatpush1.msra.mxu0 0.0
    %1889 = vmatprep.subr.mxu0 0.0
    %1890 = vmatpush1.msra.mxu0 0.0
    %1891 = vmatprep.subr.mxu0 0.0
    %1892 = vmatpush1.msra.mxu0 0.0
    %1893 = vmatprep.subr.mxu0 0.0
    %1894 = vmatpush1.msra.mxu0 0.0
    %1895 = vmatprep.subr.mxu0 0.0
    %1896 = vmatpush1.msra.mxu0 0.0
    %1897 = vmatprep.mubr.f32.mxu0 0.0
    %1898 = vmatmul.mubr.f32.gmra.mrb[0].mxu0 %v1831
    %v1899 = vpop.f32.mrb[0].mxu0
    %v1900 = vadd.f32 %v1828, %v1899
    %v1901 = vpop.f32.mrb[0].mxu0
    %1902 = vdwg.mxu0
    %1903 = vst [vmem:[#allocation15] sm:$0xff] %v1900
    // Predicated region
    $region54: #{tpu_custom_call.1} parent=1 // pred_check
      _
    $region55: #{tpu_custom_call.1} parent=1 // pred_check_branch
      %1905 = sbr.rel (0) target = $region57
    $region56: #{tpu_custom_call.1} parent=1 // pred_region
      %s1907 = ssub.s32 128, 128
      %1908 = vsyncadd [#allocation8], %s1907
      %s1910 = sshll.u32 [#allocation15], 4
      %s1911 = int_to_ptr.vmem [resolvable:$true] %s1910
      %1913 = dma.vmem_to_hbm [thread:$0]  %s1911, 128, %s7, [#allocation8]
    $region57: #{tpu_custom_call.1} parent=1 // pred_fallthru
      _
    // Predicated region
    $region58: #{tpu_custom_call.1} parent=1 // pred_check
      _
    $region59: #{tpu_custom_call.1} parent=1 // pred_check_branch
      %1915 = sbr.rel (0) target = $region61
    $region60: #{tpu_custom_call.1} parent=1 // pred_region
      %1916 = dma.done [#allocation8], 128
    $region61: #{tpu_custom_call.1} parent=1 // pred_fallthru
      _
    %1917 = vsyncpa [#allocation7], 1
    %1918 = vsyncpa [#allocation10], 1
    %1919 = vsyncpa [#allocation13], 1
    %1920 = vsyncpa [#allocation8], 1

</llo_original>
